<compile_context>
chip_gen: v7x
topology: tpu7x:2x2x1
jax: 0.10.0
libtpu: 0.0.40
codegen_flags: <defaults>
</compile_context>

<pallas_src>
import jax
import jax.numpy as jnp
from jax import lax
from jax.experimental import pallas as pl
from jax.experimental.pallas import tpu as pltpu

# ---- small, self-consistent config (mirrors NERModel.__init__ shapes) ----
VOCAB_SIZE = 20        # config['vocab_size']
EMBED      = 32        # config['embedding_size']
HIDDEN     = 32        # config['hidden_size']  (bi-LSTM -> 2*HIDDEN features)
CLASS_NUM  = 8         # config['class_num']
BATCH      = 2
SEQ        = 8
C_PAD      = 128       # lane-dense output width (>= CLASS_NUM, one vreg lane set)


def ner_bilstm_kernel(x2_ref, wih_ref, b_ref, whh_ref, wcls_ref, bcls_ref,
                      out_ref,
                      xg_ref, hseq_ref, h_ref, c_ref):
    """Fused bi-LSTM + classifier.

    x2_ref   : (T*B, 2E)   rows = [emb(t), emb(T-1-t)] flattened time-major
    wih_ref  : (2E, 8H)    block-diag input weights, gate cols interleaved f/b
    b_ref    : (1, 8H)     combined biases (b_ih + b_hh) per dir, interleaved
    whh_ref  : (2H, 8H)    block-diag recurrent weights, gate cols interleaved
    wcls_ref : (2H, C_PAD) zero-padded classifier weight (rows: [fwd | bwd])
    bcls_ref : (1, C_PAD)  zero-padded classifier bias
    out_ref  : (T*B, C_PAD) lane-dense logits slab

    scratch:
    xg_ref   : (T*B, 8H)   hoisted input projections (all t, both dirs)
    hseq_ref : (T*B, 2H)   per-time hidden states, time order, [h_f | h_b]
    h_ref    : (B, 2H)     running hidden state [h_f | h_b]
    c_ref    : (B, 2H)     running cell state   [c_f | c_b]
    """
    TB, H8 = xg_ref.shape
    H = H8 // 8
    B = h_ref.shape[0]
    T = TB // B

    # 1) Bulk input projection for both directions and all timesteps (1 MXU op).
    xg_ref[...] = (jnp.dot(x2_ref[...], wih_ref[...],
                           preferred_element_type=jnp.float32)
                   + b_ref[...])

    # 2) Zero-init recurrent state (PyTorch default h0 = c0 = 0).
    h_ref[...] = jnp.zeros_like(h_ref)
    c_ref[...] = jnp.zeros_like(c_ref)

    # 3) Fused forward/backward recurrence: one step handles time t (fwd)
    #    and time T-1-t (bwd) with a single block-diagonal h @ W_hh matmul.
    def step(t, carry):
        xg_t = xg_ref[pl.ds(t * B, B), :]                              # (B, 8H)
        gates = xg_t + jnp.dot(h_ref[...], whh_ref[...],
                               preferred_element_type=jnp.float32)     # (B, 8H)

        # vreg-wide activations (EUP), then contiguous 2H-lane gate slices:
        # columns are [i_f,i_b, f_f,f_b, g_f,g_b, o_f,o_b].
        sig = jax.nn.sigmoid(gates)
        th = jnp.tanh(gates)
        i_cat = sig[:, 0:2 * H]
        f_cat = sig[:, 2 * H:4 * H]
        g_cat = th[:, 4 * H:6 * H]
        o_cat = sig[:, 6 * H:8 * H]

        c_new = f_cat * c_ref[...] + i_cat * g_cat                     # (B, 2H)
        h_new = o_cat * jnp.tanh(c_new)                                # (B, 2H)
        c_ref[...] = c_new
        h_ref[...] = h_new

        # forward hidden belongs to time t; backward hidden to time T-1-t
        hseq_ref[pl.ds(t * B, B), 0:H] = h_new[:, 0:H]
        hseq_ref[pl.ds((T - 1 - t) * B, B), H:2 * H] = h_new[:, H:2 * H]
        return carry

    lax.fori_loop(0, T, step, 0, unroll=True)

    # 4) Classifier: one bulk lane-dense matmul + single slab store.
    out_ref[...] = (jnp.dot(hseq_ref[...], wcls_ref[...],
                            preferred_element_type=jnp.float32)
                    + bcls_ref[...])


def _interleave_gate_cols(wf, wb):
    """(rows,4H) fwd + (rows,4H) bwd -> (rows,8H) [i_f,i_b,f_f,f_b,g_f,g_b,o_f,o_b]."""
    rows, h4 = wf.shape
    h = h4 // 4
    wf4 = wf.reshape(rows, 4, h)
    wb4 = wb.reshape(rows, 4, h)
    return jnp.stack([wf4, wb4], axis=2).reshape(rows, 8 * h)


def _pack_params(p):
    """Pack per-direction weights into the fused block-diagonal layout (pure JAX)."""
    E = p["wih_f"].shape[0]
    H = p["whh_f"].shape[0]
    C = p["bcls"].shape[-1]

    zE = jnp.zeros((E, 4 * H), jnp.float32)
    zH = jnp.zeros((H, 4 * H), jnp.float32)

    # input weights: rows 0:E act on emb(t) (forward), rows E:2E on emb(T-1-t) (backward)
    w_ih_big = jnp.concatenate(
        [_interleave_gate_cols(p["wih_f"], zE),
         _interleave_gate_cols(zE, p["wih_b"])], axis=0)               # (2E, 8H)
    # recurrent weights: block-diagonal over [h_f | h_b]
    w_hh_big = jnp.concatenate(
        [_interleave_gate_cols(p["whh_f"], zH),
         _interleave_gate_cols(zH, p["whh_b"])], axis=0)               # (2H, 8H)
    b_big = _interleave_gate_cols(p["b_f"], p["b_b"])                  # (1, 8H)

    # classifier, zero-padded to a lane-dense 128-wide slab; rows = [fwd H | bwd H]
    wcls_pad = jnp.zeros((2 * H, C_PAD), jnp.float32)
    wcls_pad = wcls_pad.at[0:H, :C].set(p["wcls_f"])
    wcls_pad = wcls_pad.at[H:2 * H, :C].set(p["wcls_b"])
    bcls_pad = jnp.zeros((1, C_PAD), jnp.float32).at[:, :C].set(p["bcls"])

    return w_ih_big, b_big, w_hh_big, wcls_pad, bcls_pad


@jax.jit
def ner_forward(x_ids, params):
    """x_ids: (B, T) int32 token ids -> logits (B, T, CLASS_NUM) float32."""
    B, T = x_ids.shape
    emb = params["emb"]
    E = emb.shape[1]
    H = params["whh_f"].shape[0]
    C = params["bcls"].shape[-1]

    # wrapper-side layout plumbing: embedding lookup + time-reversal + flatten
    x_tb = jnp.transpose(x_ids.astype(jnp.int32), (1, 0))              # (T, B)
    emb_tb = jnp.take(emb, x_tb, axis=0)                               # (T, B, E)
    emb_rev = emb_tb[::-1]                                             # time-reversed
    x2 = jnp.concatenate([emb_tb, emb_rev], axis=-1).reshape(T * B, 2 * E)

    w_ih_big, b_big, w_hh_big, wcls_pad, bcls_pad = _pack_params(params)

    vmem = pl.BlockSpec(memory_space=pltpu.MemorySpace.VMEM)
    out_flat = pl.pallas_call(
        ner_bilstm_kernel,
        out_shape=jax.ShapeDtypeStruct((T * B, C_PAD), jnp.float32),
        in_specs=[vmem] * 6,
        out_specs=vmem,
        scratch_shapes=[
            pltpu.VMEM((T * B, 8 * H), jnp.float32),   # hoisted input projections
            pltpu.VMEM((T * B, 2 * H), jnp.float32),   # per-time hidden states [f|b]
            pltpu.VMEM((B, 2 * H), jnp.float32),       # fused h state [h_f | h_b]
            pltpu.VMEM((B, 2 * H), jnp.float32),       # fused c state [c_f | c_b]
        ],
    )(x2, w_ih_big, b_big, w_hh_big, wcls_pad, bcls_pad)

    logits = out_flat[:, :C].reshape(T, B, C)
    return jnp.transpose(logits, (1, 0, 2))                            # (B, T, C)


def ref_forward(x_ids, p):
    """Pure-JAX reference bi-LSTM + classifier (same math, unfused)."""
    emb = p["emb"]
    H = p["whh_f"].shape[0]
    x_emb = jnp.take(emb, x_ids.astype(jnp.int32), axis=0)             # (B, T, E)
    B, T, E = x_emb.shape
    xs = jnp.transpose(x_emb, (1, 0, 2))                               # (T, B, E)

    def run_dir(seq, wih, whh, b):
        def step(carry, x_t):
            h, c = carry
            g = x_t @ wih + h @ whh + b
            i = jax.nn.sigmoid(g[:, 0:H])
            f = jax.nn.sigmoid(g[:, H:2 * H])
            gg = jnp.tanh(g[:, 2 * H:3 * H])
            o = jax.nn.sigmoid(g[:, 3 * H:4 * H])
            c = f * c + i * gg
            h = o * jnp.tanh(c)
            return (h, c), h
        h0 = jnp.zeros((B, H), jnp.float32)
        _, hs = lax.scan(step, (h0, h0), seq)
        return hs                                                      # (T, B, H)

    hf = run_dir(xs, p["wih_f"], p["whh_f"], p["b_f"])
    hb = run_dir(xs[::-1], p["wih_b"], p["whh_b"], p["b_b"])[::-1]
    logits = hf @ p["wcls_f"] + hb @ p["wcls_b"] + p["bcls"]           # (T, B, C)
    return jnp.transpose(logits, (1, 0, 2))                            # (B, T, C)


def init_params(key):
    """Deterministic synthetic init matching the PyTorch module's shapes."""
    ks = jax.random.split(key, 12)

    def unif(k, shape, s):
        return jax.random.uniform(k, shape, jnp.float32, minval=-s, maxval=s)

    s_lstm = 1.0 / float(jnp.sqrt(jnp.float32(HIDDEN)))
    s_cls = 1.0 / float(jnp.sqrt(jnp.float32(2 * HIDDEN)))

    emb = jax.random.normal(ks[0], (VOCAB_SIZE + 1, EMBED), jnp.float32) * 0.1
    emb = emb.at[0].set(0.0)  # padding_idx=0

    params = dict(
        emb=emb,
        # forward direction (weights stored transposed: (in, 4H), gate order i,f,g,o)
        wih_f=unif(ks[1], (EMBED, 4 * HIDDEN), s_lstm),
        whh_f=unif(ks[2], (HIDDEN, 4 * HIDDEN), s_lstm),
        b_f=unif(ks[3], (1, 4 * HIDDEN), s_lstm) + unif(ks[4], (1, 4 * HIDDEN), s_lstm),
        # backward direction
        wih_b=unif(ks[5], (EMBED, 4 * HIDDEN), s_lstm),
        whh_b=unif(ks[6], (HIDDEN, 4 * HIDDEN), s_lstm),
        b_b=unif(ks[7], (1, 4 * HIDDEN), s_lstm) + unif(ks[8], (1, 4 * HIDDEN), s_lstm),
        # classifier Linear(2H, C), split into fwd/bwd halves of the weight
        wcls_f=unif(ks[9], (HIDDEN, CLASS_NUM), s_cls),
        wcls_b=unif(ks[10], (HIDDEN, CLASS_NUM), s_cls),
        bcls=unif(ks[11], (1, CLASS_NUM), s_cls),
    )
    return params


if __name__ == "__main__":
    key = jax.random.PRNGKey(0)
    pkey, xkey = jax.random.split(key)
    params = init_params(pkey)
    x = jax.random.randint(xkey, (BATCH, SEQ), 0, VOCAB_SIZE + 1, dtype=jnp.int32)

    pred = ner_forward(x, params)
    pred = jax.block_until_ready(pred)

    assert pred.shape == (BATCH, SEQ, CLASS_NUM)
    assert pred.dtype == jnp.float32
    assert bool(jnp.all(jnp.isfinite(pred)))

    # correctness vs pure-JAX reference (both f32; loose tol for MXU rounding)
    ref = jax.block_until_ready(ref_forward(x, params))
    assert bool(jnp.allclose(pred, ref, atol=5e-3, rtol=5e-3)), (
        "max abs diff %g" % float(jnp.max(jnp.abs(pred - ref))))

    print("KERNEL_OK")
</pallas_src>

<mosaic_0001>
module attributes {stable_mosaic.version = 11 : i64} {
  func.func @ner_bilstm_kernel(%arg0: memref<16x64xf32, #tpu.memory_space<vmem>>, %arg1: memref<64x256xf32, #tpu.memory_space<vmem>>, %arg2: memref<1x256xf32, #tpu.memory_space<vmem>>, %arg3: memref<64x256xf32, #tpu.memory_space<vmem>>, %arg4: memref<64x128xf32, #tpu.memory_space<vmem>>, %arg5: memref<1x128xf32, #tpu.memory_space<vmem>>, %arg6: memref<16x128xf32, #tpu.memory_space<vmem>>, %arg7: memref<16x256xf32, #tpu.memory_space<vmem>>, %arg8: memref<16x64xf32, #tpu.memory_space<vmem>>, %arg9: memref<2x64xf32, #tpu.memory_space<vmem>>, %arg10: memref<2x64xf32, #tpu.memory_space<vmem>>) attributes {dimension_semantics = [], scalar_prefetch = 0 : i64, scratch_operands = 4 : i64, tpu.core_type = #tpu.core_type<tc>} {
    %c0 = arith.constant 0 : index
    %c0_0 = arith.constant 0 : index
    %0 = vector.load %arg0[%c0, %c0_0] : memref<16x64xf32, #tpu.memory_space<vmem>>, vector<16x64xf32>
    %c0_1 = arith.constant 0 : index
    %c0_2 = arith.constant 0 : index
    %1 = vector.load %arg1[%c0_1, %c0_2] : memref<64x256xf32, #tpu.memory_space<vmem>>, vector<64x256xf32>
    %cst = arith.constant dense<0.000000e+00> : vector<16x256xf32>
    %2 = tpu.matmul %0, %1, %cst {dimension_numbers = #tpu.dot_dimension_numbers<[1], [0], [0], [1], [0, 0, 1, 1], [], []>} : vector<16x64xf32>, vector<64x256xf32>, vector<16x256xf32> -> vector<16x256xf32>
    %c0_3 = arith.constant 0 : index
    %c0_4 = arith.constant 0 : index
    %3 = vector.load %arg2[%c0_3, %c0_4] : memref<1x256xf32, #tpu.memory_space<vmem>>, vector<1x256xf32>
    %4 = vector.broadcast %3 : vector<1x256xf32> to vector<16x256xf32>
    %5 = arith.addf %2, %4 : vector<16x256xf32>
    %c0_5 = arith.constant 0 : index
    %c0_6 = arith.constant 0 : index
    %6 = vector.load %arg7[%c0_5, %c0_6] : memref<16x256xf32, #tpu.memory_space<vmem>>, vector<16x256xf32>
    tpu.vector_store %arg7[%c0_5, %c0_6], %5 {strides = array<i32>} : memref<16x256xf32, #tpu.memory_space<vmem>>, vector<16x256xf32>,
    %cst_7 = arith.constant 0.000000e+00 : f32
    %7 = vector.broadcast %cst_7 : f32 to vector<2x64xf32>
    %c0_8 = arith.constant 0 : index
    %c0_9 = arith.constant 0 : index
    %8 = vector.load %arg9[%c0_8, %c0_9] : memref<2x64xf32, #tpu.memory_space<vmem>>, vector<2x64xf32>
    tpu.vector_store %arg9[%c0_8, %c0_9], %7 {strides = array<i32>} : memref<2x64xf32, #tpu.memory_space<vmem>>, vector<2x64xf32>,
    %cst_10 = arith.constant 0.000000e+00 : f32
    %9 = vector.broadcast %cst_10 : f32 to vector<2x64xf32>
    %c0_11 = arith.constant 0 : index
    %c0_12 = arith.constant 0 : index
    %10 = vector.load %arg10[%c0_11, %c0_12] : memref<2x64xf32, #tpu.memory_space<vmem>>, vector<2x64xf32>
    tpu.vector_store %arg10[%c0_11, %c0_12], %9 {strides = array<i32>} : memref<2x64xf32, #tpu.memory_space<vmem>>, vector<2x64xf32>,
    %c0_i32 = arith.constant 0 : i32
    %c2_i32 = arith.constant 2 : i32
    %11 = arith.muli %c0_i32, %c2_i32 : i32
    %12 = arith.index_cast %11 : i32 to index
    %c0_13 = arith.constant 0 : index
    %13 = vector.load %arg7[%12, %c0_13] : memref<16x256xf32, #tpu.memory_space<vmem>>, vector<2x256xf32>
    %c0_14 = arith.constant 0 : index
    %c0_15 = arith.constant 0 : index
    %14 = vector.load %arg9[%c0_14, %c0_15] : memref<2x64xf32, #tpu.memory_space<vmem>>, vector<2x64xf32>
    %c0_16 = arith.constant 0 : index
    %c0_17 = arith.constant 0 : index
    %15 = vector.load %arg3[%c0_16, %c0_17] : memref<64x256xf32, #tpu.memory_space<vmem>>, vector<64x256xf32>
    %cst_18 = arith.constant dense<0.000000e+00> : vector<2x256xf32>
    %16 = tpu.matmul %14, %15, %cst_18 {dimension_numbers = #tpu.dot_dimension_numbers<[1], [0], [0], [1], [0, 0, 1, 1], [], []>} : vector<2x64xf32>, vector<64x256xf32>, vector<2x256xf32> -> vector<2x256xf32>
    %17 = arith.addf %13, %16 : vector<2x256xf32>
    %18 = arith.negf %17 : vector<2x256xf32>
    %19 = math.exp %18 : vector<2x256xf32>
    %cst_19 = arith.constant 1.000000e+00 : f32
    %20 = vector.broadcast %cst_19 : f32 to vector<2x256xf32>
    %21 = arith.addf %20, %19 : vector<2x256xf32>
    %22 = arith.divf %20, %21 : vector<2x256xf32>
    %23 = math.tanh %17 : vector<2x256xf32>
    %24 = vector.extract_strided_slice %22 {offsets = [0, 0], sizes = [2, 64], strides = [1, 1]} : vector<2x256xf32> to vector<2x64xf32>
    %25 = vector.extract_strided_slice %22 {offsets = [0, 64], sizes = [2, 64], strides = [1, 1]} : vector<2x256xf32> to vector<2x64xf32>
    %26 = vector.extract_strided_slice %23 {offsets = [0, 128], sizes = [2, 64], strides = [1, 1]} : vector<2x256xf32> to vector<2x64xf32>
    %27 = vector.extract_strided_slice %22 {offsets = [0, 192], sizes = [2, 64], strides = [1, 1]} : vector<2x256xf32> to vector<2x64xf32>
    %c0_20 = arith.constant 0 : index
    %c0_21 = arith.constant 0 : index
    %28 = vector.load %arg10[%c0_20, %c0_21] : memref<2x64xf32, #tpu.memory_space<vmem>>, vector<2x64xf32>
    %29 = arith.mulf %25, %28 : vector<2x64xf32>
    %30 = arith.mulf %24, %26 : vector<2x64xf32>
    %31 = arith.addf %29, %30 : vector<2x64xf32>
    %32 = math.tanh %31 : vector<2x64xf32>
    %33 = arith.mulf %27, %32 : vector<2x64xf32>
    %c0_22 = arith.constant 0 : index
    %c0_23 = arith.constant 0 : index
    %34 = vector.load %arg10[%c0_22, %c0_23] : memref<2x64xf32, #tpu.memory_space<vmem>>, vector<2x64xf32>
    tpu.vector_store %arg10[%c0_22, %c0_23], %31 {strides = array<i32>} : memref<2x64xf32, #tpu.memory_space<vmem>>, vector<2x64xf32>,
    %c0_24 = arith.constant 0 : index
    %c0_25 = arith.constant 0 : index
    %35 = vector.load %arg9[%c0_24, %c0_25] : memref<2x64xf32, #tpu.memory_space<vmem>>, vector<2x64xf32>
    tpu.vector_store %arg9[%c0_24, %c0_25], %33 {strides = array<i32>} : memref<2x64xf32, #tpu.memory_space<vmem>>, vector<2x64xf32>,
    %36 = vector.extract_strided_slice %33 {offsets = [0, 0], sizes = [2, 32], strides = [1, 1]} : vector<2x64xf32> to vector<2x32xf32>
    %c2_i32_26 = arith.constant 2 : i32
    %37 = arith.muli %c0_i32, %c2_i32_26 : i32
    %38 = arith.index_cast %37 : i32 to index
    %c0_27 = arith.constant 0 : index
    %39 = vector.load %arg8[%38, %c0_27] : memref<16x64xf32, #tpu.memory_space<vmem>>, vector<2x32xf32>
    tpu.vector_store %arg8[%38, %c0_27], %36 {strides = array<i32>} : memref<16x64xf32, #tpu.memory_space<vmem>>, vector<2x32xf32>,
    %40 = vector.extract_strided_slice %33 {offsets = [0, 32], sizes = [2, 32], strides = [1, 1]} : vector<2x64xf32> to vector<2x32xf32>
    %c7_i32 = arith.constant 7 : i32
    %41 = arith.subi %c7_i32, %c0_i32 : i32
    %c2_i32_28 = arith.constant 2 : i32
    %42 = arith.muli %41, %c2_i32_28 : i32
    %43 = arith.index_cast %42 : i32 to index
    %c32 = arith.constant 32 : index
    %44 = vector.load %arg8[%43, %c32] : memref<16x64xf32, #tpu.memory_space<vmem>>, vector<2x32xf32>
    tpu.vector_store %arg8[%43, %c32], %40 {strides = array<i32>} : memref<16x64xf32, #tpu.memory_space<vmem>>, vector<2x32xf32>,
    %c1_i32 = arith.constant 1 : i32
    %c2_i32_29 = arith.constant 2 : i32
    %45 = arith.muli %c1_i32, %c2_i32_29 : i32
    %46 = arith.index_cast %45 : i32 to index
    %c0_30 = arith.constant 0 : index
    %47 = vector.load %arg7[%46, %c0_30] : memref<16x256xf32, #tpu.memory_space<vmem>>, vector<2x256xf32>
    %c0_31 = arith.constant 0 : index
    %c0_32 = arith.constant 0 : index
    %48 = vector.load %arg9[%c0_31, %c0_32] : memref<2x64xf32, #tpu.memory_space<vmem>>, vector<2x64xf32>
    %c0_33 = arith.constant 0 : index
    %c0_34 = arith.constant 0 : index
    %49 = vector.load %arg3[%c0_33, %c0_34] : memref<64x256xf32, #tpu.memory_space<vmem>>, vector<64x256xf32>
    %cst_35 = arith.constant dense<0.000000e+00> : vector<2x256xf32>
    %50 = tpu.matmul %48, %49, %cst_35 {dimension_numbers = #tpu.dot_dimension_numbers<[1], [0], [0], [1], [0, 0, 1, 1], [], []>} : vector<2x64xf32>, vector<64x256xf32>, vector<2x256xf32> -> vector<2x256xf32>
    %51 = arith.addf %47, %50 : vector<2x256xf32>
    %52 = arith.negf %51 : vector<2x256xf32>
    %53 = math.exp %52 : vector<2x256xf32>
    %cst_36 = arith.constant 1.000000e+00 : f32
    %54 = vector.broadcast %cst_36 : f32 to vector<2x256xf32>
    %55 = arith.addf %54, %53 : vector<2x256xf32>
    %56 = arith.divf %54, %55 : vector<2x256xf32>
    %57 = math.tanh %51 : vector<2x256xf32>
    %58 = vector.extract_strided_slice %56 {offsets = [0, 0], sizes = [2, 64], strides = [1, 1]} : vector<2x256xf32> to vector<2x64xf32>
    %59 = vector.extract_strided_slice %56 {offsets = [0, 64], sizes = [2, 64], strides = [1, 1]} : vector<2x256xf32> to vector<2x64xf32>
    %60 = vector.extract_strided_slice %57 {offsets = [0, 128], sizes = [2, 64], strides = [1, 1]} : vector<2x256xf32> to vector<2x64xf32>
    %61 = vector.extract_strided_slice %56 {offsets = [0, 192], sizes = [2, 64], strides = [1, 1]} : vector<2x256xf32> to vector<2x64xf32>
    %c0_37 = arith.constant 0 : index
    %c0_38 = arith.constant 0 : index
    %62 = vector.load %arg10[%c0_37, %c0_38] : memref<2x64xf32, #tpu.memory_space<vmem>>, vector<2x64xf32>
    %63 = arith.mulf %59, %62 : vector<2x64xf32>
    %64 = arith.mulf %58, %60 : vector<2x64xf32>
    %65 = arith.addf %63, %64 : vector<2x64xf32>
    %66 = math.tanh %65 : vector<2x64xf32>
    %67 = arith.mulf %61, %66 : vector<2x64xf32>
    %c0_39 = arith.constant 0 : index
    %c0_40 = arith.constant 0 : index
    %68 = vector.load %arg10[%c0_39, %c0_40] : memref<2x64xf32, #tpu.memory_space<vmem>>, vector<2x64xf32>
    tpu.vector_store %arg10[%c0_39, %c0_40], %65 {strides = array<i32>} : memref<2x64xf32, #tpu.memory_space<vmem>>, vector<2x64xf32>,
    %c0_41 = arith.constant 0 : index
    %c0_42 = arith.constant 0 : index
    %69 = vector.load %arg9[%c0_41, %c0_42] : memref<2x64xf32, #tpu.memory_space<vmem>>, vector<2x64xf32>
    tpu.vector_store %arg9[%c0_41, %c0_42], %67 {strides = array<i32>} : memref<2x64xf32, #tpu.memory_space<vmem>>, vector<2x64xf32>,
    %70 = vector.extract_strided_slice %67 {offsets = [0, 0], sizes = [2, 32], strides = [1, 1]} : vector<2x64xf32> to vector<2x32xf32>
    %c2_i32_43 = arith.constant 2 : i32
    %71 = arith.muli %c1_i32, %c2_i32_43 : i32
    %72 = arith.index_cast %71 : i32 to index
    %c0_44 = arith.constant 0 : index
    %73 = vector.load %arg8[%72, %c0_44] : memref<16x64xf32, #tpu.memory_space<vmem>>, vector<2x32xf32>
    tpu.vector_store %arg8[%72, %c0_44], %70 {strides = array<i32>} : memref<16x64xf32, #tpu.memory_space<vmem>>, vector<2x32xf32>,
    %74 = vector.extract_strided_slice %67 {offsets = [0, 32], sizes = [2, 32], strides = [1, 1]} : vector<2x64xf32> to vector<2x32xf32>
    %c7_i32_45 = arith.constant 7 : i32
    %75 = arith.subi %c7_i32_45, %c1_i32 : i32
    %c2_i32_46 = arith.constant 2 : i32
    %76 = arith.muli %75, %c2_i32_46 : i32
    %77 = arith.index_cast %76 : i32 to index
    %c32_47 = arith.constant 32 : index
    %78 = vector.load %arg8[%77, %c32_47] : memref<16x64xf32, #tpu.memory_space<vmem>>, vector<2x32xf32>
    tpu.vector_store %arg8[%77, %c32_47], %74 {strides = array<i32>} : memref<16x64xf32, #tpu.memory_space<vmem>>, vector<2x32xf32>,
    %c2_i32_48 = arith.constant 2 : i32
    %c2_i32_49 = arith.constant 2 : i32
    %79 = arith.muli %c2_i32_48, %c2_i32_49 : i32
    %80 = arith.index_cast %79 : i32 to index
    %c0_50 = arith.constant 0 : index
    %81 = vector.load %arg7[%80, %c0_50] : memref<16x256xf32, #tpu.memory_space<vmem>>, vector<2x256xf32>
    %c0_51 = arith.constant 0 : index
    %c0_52 = arith.constant 0 : index
    %82 = vector.load %arg9[%c0_51, %c0_52] : memref<2x64xf32, #tpu.memory_space<vmem>>, vector<2x64xf32>
    %c0_53 = arith.constant 0 : index
    %c0_54 = arith.constant 0 : index
    %83 = vector.load %arg3[%c0_53, %c0_54] : memref<64x256xf32, #tpu.memory_space<vmem>>, vector<64x256xf32>
    %cst_55 = arith.constant dense<0.000000e+00> : vector<2x256xf32>
    %84 = tpu.matmul %82, %83, %cst_55 {dimension_numbers = #tpu.dot_dimension_numbers<[1], [0], [0], [1], [0, 0, 1, 1], [], []>} : vector<2x64xf32>, vector<64x256xf32>, vector<2x256xf32> -> vector<2x256xf32>
    %85 = arith.addf %81, %84 : vector<2x256xf32>
    %86 = arith.negf %85 : vector<2x256xf32>
    %87 = math.exp %86 : vector<2x256xf32>
    %cst_56 = arith.constant 1.000000e+00 : f32
    %88 = vector.broadcast %cst_56 : f32 to vector<2x256xf32>
    %89 = arith.addf %88, %87 : vector<2x256xf32>
    %90 = arith.divf %88, %89 : vector<2x256xf32>
    %91 = math.tanh %85 : vector<2x256xf32>
    %92 = vector.extract_strided_slice %90 {offsets = [0, 0], sizes = [2, 64], strides = [1, 1]} : vector<2x256xf32> to vector<2x64xf32>
    %93 = vector.extract_strided_slice %90 {offsets = [0, 64], sizes = [2, 64], strides = [1, 1]} : vector<2x256xf32> to vector<2x64xf32>
    %94 = vector.extract_strided_slice %91 {offsets = [0, 128], sizes = [2, 64], strides = [1, 1]} : vector<2x256xf32> to vector<2x64xf32>
    %95 = vector.extract_strided_slice %90 {offsets = [0, 192], sizes = [2, 64], strides = [1, 1]} : vector<2x256xf32> to vector<2x64xf32>
    %c0_57 = arith.constant 0 : index
    %c0_58 = arith.constant 0 : index
    %96 = vector.load %arg10[%c0_57, %c0_58] : memref<2x64xf32, #tpu.memory_space<vmem>>, vector<2x64xf32>
    %97 = arith.mulf %93, %96 : vector<2x64xf32>
    %98 = arith.mulf %92, %94 : vector<2x64xf32>
    %99 = arith.addf %97, %98 : vector<2x64xf32>
    %100 = math.tanh %99 : vector<2x64xf32>
    %101 = arith.mulf %95, %100 : vector<2x64xf32>
    %c0_59 = arith.constant 0 : index
    %c0_60 = arith.constant 0 : index
    %102 = vector.load %arg10[%c0_59, %c0_60] : memref<2x64xf32, #tpu.memory_space<vmem>>, vector<2x64xf32>
    tpu.vector_store %arg10[%c0_59, %c0_60], %99 {strides = array<i32>} : memref<2x64xf32, #tpu.memory_space<vmem>>, vector<2x64xf32>,
    %c0_61 = arith.constant 0 : index
    %c0_62 = arith.constant 0 : index
    %103 = vector.load %arg9[%c0_61, %c0_62] : memref<2x64xf32, #tpu.memory_space<vmem>>, vector<2x64xf32>
    tpu.vector_store %arg9[%c0_61, %c0_62], %101 {strides = array<i32>} : memref<2x64xf32, #tpu.memory_space<vmem>>, vector<2x64xf32>,
    %104 = vector.extract_strided_slice %101 {offsets = [0, 0], sizes = [2, 32], strides = [1, 1]} : vector<2x64xf32> to vector<2x32xf32>
    %c2_i32_63 = arith.constant 2 : i32
    %105 = arith.muli %c2_i32_48, %c2_i32_63 : i32
    %106 = arith.index_cast %105 : i32 to index
    %c0_64 = arith.constant 0 : index
    %107 = vector.load %arg8[%106, %c0_64] : memref<16x64xf32, #tpu.memory_space<vmem>>, vector<2x32xf32>
    tpu.vector_store %arg8[%106, %c0_64], %104 {strides = array<i32>} : memref<16x64xf32, #tpu.memory_space<vmem>>, vector<2x32xf32>,
    %108 = vector.extract_strided_slice %101 {offsets = [0, 32], sizes = [2, 32], strides = [1, 1]} : vector<2x64xf32> to vector<2x32xf32>
    %c7_i32_65 = arith.constant 7 : i32
    %109 = arith.subi %c7_i32_65, %c2_i32_48 : i32
    %c2_i32_66 = arith.constant 2 : i32
    %110 = arith.muli %109, %c2_i32_66 : i32
    %111 = arith.index_cast %110 : i32 to index
    %c32_67 = arith.constant 32 : index
    %112 = vector.load %arg8[%111, %c32_67] : memref<16x64xf32, #tpu.memory_space<vmem>>, vector<2x32xf32>
    tpu.vector_store %arg8[%111, %c32_67], %108 {strides = array<i32>} : memref<16x64xf32, #tpu.memory_space<vmem>>, vector<2x32xf32>,
    %c3_i32 = arith.constant 3 : i32
    %c2_i32_68 = arith.constant 2 : i32
    %113 = arith.muli %c3_i32, %c2_i32_68 : i32
    %114 = arith.index_cast %113 : i32 to index
    %c0_69 = arith.constant 0 : index
    %115 = vector.load %arg7[%114, %c0_69] : memref<16x256xf32, #tpu.memory_space<vmem>>, vector<2x256xf32>
    %c0_70 = arith.constant 0 : index
    %c0_71 = arith.constant 0 : index
    %116 = vector.load %arg9[%c0_70, %c0_71] : memref<2x64xf32, #tpu.memory_space<vmem>>, vector<2x64xf32>
    %c0_72 = arith.constant 0 : index
    %c0_73 = arith.constant 0 : index
    %117 = vector.load %arg3[%c0_72, %c0_73] : memref<64x256xf32, #tpu.memory_space<vmem>>, vector<64x256xf32>
    %cst_74 = arith.constant dense<0.000000e+00> : vector<2x256xf32>
    %118 = tpu.matmul %116, %117, %cst_74 {dimension_numbers = #tpu.dot_dimension_numbers<[1], [0], [0], [1], [0, 0, 1, 1], [], []>} : vector<2x64xf32>, vector<64x256xf32>, vector<2x256xf32> -> vector<2x256xf32>
    %119 = arith.addf %115, %118 : vector<2x256xf32>
    %120 = arith.negf %119 : vector<2x256xf32>
    %121 = math.exp %120 : vector<2x256xf32>
    %cst_75 = arith.constant 1.000000e+00 : f32
    %122 = vector.broadcast %cst_75 : f32 to vector<2x256xf32>
    %123 = arith.addf %122, %121 : vector<2x256xf32>
    %124 = arith.divf %122, %123 : vector<2x256xf32>
    %125 = math.tanh %119 : vector<2x256xf32>
    %126 = vector.extract_strided_slice %124 {offsets = [0, 0], sizes = [2, 64], strides = [1, 1]} : vector<2x256xf32> to vector<2x64xf32>
    %127 = vector.extract_strided_slice %124 {offsets = [0, 64], sizes = [2, 64], strides = [1, 1]} : vector<2x256xf32> to vector<2x64xf32>
    %128 = vector.extract_strided_slice %125 {offsets = [0, 128], sizes = [2, 64], strides = [1, 1]} : vector<2x256xf32> to vector<2x64xf32>
    %129 = vector.extract_strided_slice %124 {offsets = [0, 192], sizes = [2, 64], strides = [1, 1]} : vector<2x256xf32> to vector<2x64xf32>
    %c0_76 = arith.constant 0 : index
    %c0_77 = arith.constant 0 : index
    %130 = vector.load %arg10[%c0_76, %c0_77] : memref<2x64xf32, #tpu.memory_space<vmem>>, vector<2x64xf32>
    %131 = arith.mulf %127, %130 : vector<2x64xf32>
    %132 = arith.mulf %126, %128 : vector<2x64xf32>
    %133 = arith.addf %131, %132 : vector<2x64xf32>
    %134 = math.tanh %133 : vector<2x64xf32>
    %135 = arith.mulf %129, %134 : vector<2x64xf32>
    %c0_78 = arith.constant 0 : index
    %c0_79 = arith.constant 0 : index
    %136 = vector.load %arg10[%c0_78, %c0_79] : memref<2x64xf32, #tpu.memory_space<vmem>>, vector<2x64xf32>
    tpu.vector_store %arg10[%c0_78, %c0_79], %133 {strides = array<i32>} : memref<2x64xf32, #tpu.memory_space<vmem>>, vector<2x64xf32>,
    %c0_80 = arith.constant 0 : index
    %c0_81 = arith.constant 0 : index
    %137 = vector.load %arg9[%c0_80, %c0_81] : memref<2x64xf32, #tpu.memory_space<vmem>>, vector<2x64xf32>
    tpu.vector_store %arg9[%c0_80, %c0_81], %135 {strides = array<i32>} : memref<2x64xf32, #tpu.memory_space<vmem>>, vector<2x64xf32>,
    %138 = vector.extract_strided_slice %135 {offsets = [0, 0], sizes = [2, 32], strides = [1, 1]} : vector<2x64xf32> to vector<2x32xf32>
    %c2_i32_82 = arith.constant 2 : i32
    %139 = arith.muli %c3_i32, %c2_i32_82 : i32
    %140 = arith.index_cast %139 : i32 to index
    %c0_83 = arith.constant 0 : index
    %141 = vector.load %arg8[%140, %c0_83] : memref<16x64xf32, #tpu.memory_space<vmem>>, vector<2x32xf32>
    tpu.vector_store %arg8[%140, %c0_83], %138 {strides = array<i32>} : memref<16x64xf32, #tpu.memory_space<vmem>>, vector<2x32xf32>,
    %142 = vector.extract_strided_slice %135 {offsets = [0, 32], sizes = [2, 32], strides = [1, 1]} : vector<2x64xf32> to vector<2x32xf32>
    %c7_i32_84 = arith.constant 7 : i32
    %143 = arith.subi %c7_i32_84, %c3_i32 : i32
    %c2_i32_85 = arith.constant 2 : i32
    %144 = arith.muli %143, %c2_i32_85 : i32
    %145 = arith.index_cast %144 : i32 to index
    %c32_86 = arith.constant 32 : index
    %146 = vector.load %arg8[%145, %c32_86] : memref<16x64xf32, #tpu.memory_space<vmem>>, vector<2x32xf32>
    tpu.vector_store %arg8[%145, %c32_86], %142 {strides = array<i32>} : memref<16x64xf32, #tpu.memory_space<vmem>>, vector<2x32xf32>,
    %c4_i32 = arith.constant 4 : i32
    %c2_i32_87 = arith.constant 2 : i32
    %147 = arith.muli %c4_i32, %c2_i32_87 : i32
    %148 = arith.index_cast %147 : i32 to index
    %c0_88 = arith.constant 0 : index
    %149 = vector.load %arg7[%148, %c0_88] : memref<16x256xf32, #tpu.memory_space<vmem>>, vector<2x256xf32>
    %c0_89 = arith.constant 0 : index
    %c0_90 = arith.constant 0 : index
    %150 = vector.load %arg9[%c0_89, %c0_90] : memref<2x64xf32, #tpu.memory_space<vmem>>, vector<2x64xf32>
    %c0_91 = arith.constant 0 : index
    %c0_92 = arith.constant 0 : index
    %151 = vector.load %arg3[%c0_91, %c0_92] : memref<64x256xf32, #tpu.memory_space<vmem>>, vector<64x256xf32>
    %cst_93 = arith.constant dense<0.000000e+00> : vector<2x256xf32>
    %152 = tpu.matmul %150, %151, %cst_93 {dimension_numbers = #tpu.dot_dimension_numbers<[1], [0], [0], [1], [0, 0, 1, 1], [], []>} : vector<2x64xf32>, vector<64x256xf32>, vector<2x256xf32> -> vector<2x256xf32>
    %153 = arith.addf %149, %152 : vector<2x256xf32>
    %154 = arith.negf %153 : vector<2x256xf32>
    %155 = math.exp %154 : vector<2x256xf32>
    %cst_94 = arith.constant 1.000000e+00 : f32
    %156 = vector.broadcast %cst_94 : f32 to vector<2x256xf32>
    %157 = arith.addf %156, %155 : vector<2x256xf32>
    %158 = arith.divf %156, %157 : vector<2x256xf32>
    %159 = math.tanh %153 : vector<2x256xf32>
    %160 = vector.extract_strided_slice %158 {offsets = [0, 0], sizes = [2, 64], strides = [1, 1]} : vector<2x256xf32> to vector<2x64xf32>
    %161 = vector.extract_strided_slice %158 {offsets = [0, 64], sizes = [2, 64], strides = [1, 1]} : vector<2x256xf32> to vector<2x64xf32>
    %162 = vector.extract_strided_slice %159 {offsets = [0, 128], sizes = [2, 64], strides = [1, 1]} : vector<2x256xf32> to vector<2x64xf32>
    %163 = vector.extract_strided_slice %158 {offsets = [0, 192], sizes = [2, 64], strides = [1, 1]} : vector<2x256xf32> to vector<2x64xf32>
    %c0_95 = arith.constant 0 : index
    %c0_96 = arith.constant 0 : index
    %164 = vector.load %arg10[%c0_95, %c0_96] : memref<2x64xf32, #tpu.memory_space<vmem>>, vector<2x64xf32>
    %165 = arith.mulf %161, %164 : vector<2x64xf32>
    %166 = arith.mulf %160, %162 : vector<2x64xf32>
    %167 = arith.addf %165, %166 : vector<2x64xf32>
    %168 = math.tanh %167 : vector<2x64xf32>
    %169 = arith.mulf %163, %168 : vector<2x64xf32>
    %c0_97 = arith.constant 0 : index
    %c0_98 = arith.constant 0 : index
    %170 = vector.load %arg10[%c0_97, %c0_98] : memref<2x64xf32, #tpu.memory_space<vmem>>, vector<2x64xf32>
    tpu.vector_store %arg10[%c0_97, %c0_98], %167 {strides = array<i32>} : memref<2x64xf32, #tpu.memory_space<vmem>>, vector<2x64xf32>,
    %c0_99 = arith.constant 0 : index
    %c0_100 = arith.constant 0 : index
    %171 = vector.load %arg9[%c0_99, %c0_100] : memref<2x64xf32, #tpu.memory_space<vmem>>, vector<2x64xf32>
    tpu.vector_store %arg9[%c0_99, %c0_100], %169 {strides = array<i32>} : memref<2x64xf32, #tpu.memory_space<vmem>>, vector<2x64xf32>,
    %172 = vector.extract_strided_slice %169 {offsets = [0, 0], sizes = [2, 32], strides = [1, 1]} : vector<2x64xf32> to vector<2x32xf32>
    %c2_i32_101 = arith.constant 2 : i32
    %173 = arith.muli %c4_i32, %c2_i32_101 : i32
    %174 = arith.index_cast %173 : i32 to index
    %c0_102 = arith.constant 0 : index
    %175 = vector.load %arg8[%174, %c0_102] : memref<16x64xf32, #tpu.memory_space<vmem>>, vector<2x32xf32>
    tpu.vector_store %arg8[%174, %c0_102], %172 {strides = array<i32>} : memref<16x64xf32, #tpu.memory_space<vmem>>, vector<2x32xf32>,
    %176 = vector.extract_strided_slice %169 {offsets = [0, 32], sizes = [2, 32], strides = [1, 1]} : vector<2x64xf32> to vector<2x32xf32>
    %c7_i32_103 = arith.constant 7 : i32
    %177 = arith.subi %c7_i32_103, %c4_i32 : i32
    %c2_i32_104 = arith.constant 2 : i32
    %178 = arith.muli %177, %c2_i32_104 : i32
    %179 = arith.index_cast %178 : i32 to index
    %c32_105 = arith.constant 32 : index
    %180 = vector.load %arg8[%179, %c32_105] : memref<16x64xf32, #tpu.memory_space<vmem>>, vector<2x32xf32>
    tpu.vector_store %arg8[%179, %c32_105], %176 {strides = array<i32>} : memref<16x64xf32, #tpu.memory_space<vmem>>, vector<2x32xf32>,
    %c5_i32 = arith.constant 5 : i32
    %c2_i32_106 = arith.constant 2 : i32
    %181 = arith.muli %c5_i32, %c2_i32_106 : i32
    %182 = arith.index_cast %181 : i32 to index
    %c0_107 = arith.constant 0 : index
    %183 = vector.load %arg7[%182, %c0_107] : memref<16x256xf32, #tpu.memory_space<vmem>>, vector<2x256xf32>
    %c0_108 = arith.constant 0 : index
    %c0_109 = arith.constant 0 : index
    %184 = vector.load %arg9[%c0_108, %c0_109] : memref<2x64xf32, #tpu.memory_space<vmem>>, vector<2x64xf32>
    %c0_110 = arith.constant 0 : index
    %c0_111 = arith.constant 0 : index
    %185 = vector.load %arg3[%c0_110, %c0_111] : memref<64x256xf32, #tpu.memory_space<vmem>>, vector<64x256xf32>
    %cst_112 = arith.constant dense<0.000000e+00> : vector<2x256xf32>
    %186 = tpu.matmul %184, %185, %cst_112 {dimension_numbers = #tpu.dot_dimension_numbers<[1], [0], [0], [1], [0, 0, 1, 1], [], []>} : vector<2x64xf32>, vector<64x256xf32>, vector<2x256xf32> -> vector<2x256xf32>
    %187 = arith.addf %183, %186 : vector<2x256xf32>
    %188 = arith.negf %187 : vector<2x256xf32>
    %189 = math.exp %188 : vector<2x256xf32>
    %cst_113 = arith.constant 1.000000e+00 : f32
    %190 = vector.broadcast %cst_113 : f32 to vector<2x256xf32>
    %191 = arith.addf %190, %189 : vector<2x256xf32>
    %192 = arith.divf %190, %191 : vector<2x256xf32>
    %193 = math.tanh %187 : vector<2x256xf32>
    %194 = vector.extract_strided_slice %192 {offsets = [0, 0], sizes = [2, 64], strides = [1, 1]} : vector<2x256xf32> to vector<2x64xf32>
    %195 = vector.extract_strided_slice %192 {offsets = [0, 64], sizes = [2, 64], strides = [1, 1]} : vector<2x256xf32> to vector<2x64xf32>
    %196 = vector.extract_strided_slice %193 {offsets = [0, 128], sizes = [2, 64], strides = [1, 1]} : vector<2x256xf32> to vector<2x64xf32>
    %197 = vector.extract_strided_slice %192 {offsets = [0, 192], sizes = [2, 64], strides = [1, 1]} : vector<2x256xf32> to vector<2x64xf32>
    %c0_114 = arith.constant 0 : index
    %c0_115 = arith.constant 0 : index
    %198 = vector.load %arg10[%c0_114, %c0_115] : memref<2x64xf32, #tpu.memory_space<vmem>>, vector<2x64xf32>
    %199 = arith.mulf %195, %198 : vector<2x64xf32>
    %200 = arith.mulf %194, %196 : vector<2x64xf32>
    %201 = arith.addf %199, %200 : vector<2x64xf32>
    %202 = math.tanh %201 : vector<2x64xf32>
    %203 = arith.mulf %197, %202 : vector<2x64xf32>
    %c0_116 = arith.constant 0 : index
    %c0_117 = arith.constant 0 : index
    %204 = vector.load %arg10[%c0_116, %c0_117] : memref<2x64xf32, #tpu.memory_space<vmem>>, vector<2x64xf32>
    tpu.vector_store %arg10[%c0_116, %c0_117], %201 {strides = array<i32>} : memref<2x64xf32, #tpu.memory_space<vmem>>, vector<2x64xf32>,
    %c0_118 = arith.constant 0 : index
    %c0_119 = arith.constant 0 : index
    %205 = vector.load %arg9[%c0_118, %c0_119] : memref<2x64xf32, #tpu.memory_space<vmem>>, vector<2x64xf32>
    tpu.vector_store %arg9[%c0_118, %c0_119], %203 {strides = array<i32>} : memref<2x64xf32, #tpu.memory_space<vmem>>, vector<2x64xf32>,
    %206 = vector.extract_strided_slice %203 {offsets = [0, 0], sizes = [2, 32], strides = [1, 1]} : vector<2x64xf32> to vector<2x32xf32>
    %c2_i32_120 = arith.constant 2 : i32
    %207 = arith.muli %c5_i32, %c2_i32_120 : i32
    %208 = arith.index_cast %207 : i32 to index
    %c0_121 = arith.constant 0 : index
    %209 = vector.load %arg8[%208, %c0_121] : memref<16x64xf32, #tpu.memory_space<vmem>>, vector<2x32xf32>
    tpu.vector_store %arg8[%208, %c0_121], %206 {strides = array<i32>} : memref<16x64xf32, #tpu.memory_space<vmem>>, vector<2x32xf32>,
    %210 = vector.extract_strided_slice %203 {offsets = [0, 32], sizes = [2, 32], strides = [1, 1]} : vector<2x64xf32> to vector<2x32xf32>
    %c7_i32_122 = arith.constant 7 : i32
    %211 = arith.subi %c7_i32_122, %c5_i32 : i32
    %c2_i32_123 = arith.constant 2 : i32
    %212 = arith.muli %211, %c2_i32_123 : i32
    %213 = arith.index_cast %212 : i32 to index
    %c32_124 = arith.constant 32 : index
    %214 = vector.load %arg8[%213, %c32_124] : memref<16x64xf32, #tpu.memory_space<vmem>>, vector<2x32xf32>
    tpu.vector_store %arg8[%213, %c32_124], %210 {strides = array<i32>} : memref<16x64xf32, #tpu.memory_space<vmem>>, vector<2x32xf32>,
    %c6_i32 = arith.constant 6 : i32
    %c2_i32_125 = arith.constant 2 : i32
    %215 = arith.muli %c6_i32, %c2_i32_125 : i32
    %216 = arith.index_cast %215 : i32 to index
    %c0_126 = arith.constant 0 : index
    %217 = vector.load %arg7[%216, %c0_126] : memref<16x256xf32, #tpu.memory_space<vmem>>, vector<2x256xf32>
    %c0_127 = arith.constant 0 : index
    %c0_128 = arith.constant 0 : index
    %218 = vector.load %arg9[%c0_127, %c0_128] : memref<2x64xf32, #tpu.memory_space<vmem>>, vector<2x64xf32>
    %c0_129 = arith.constant 0 : index
    %c0_130 = arith.constant 0 : index
    %219 = vector.load %arg3[%c0_129, %c0_130] : memref<64x256xf32, #tpu.memory_space<vmem>>, vector<64x256xf32>
    %cst_131 = arith.constant dense<0.000000e+00> : vector<2x256xf32>
    %220 = tpu.matmul %218, %219, %cst_131 {dimension_numbers = #tpu.dot_dimension_numbers<[1], [0], [0], [1], [0, 0, 1, 1], [], []>} : vector<2x64xf32>, vector<64x256xf32>, vector<2x256xf32> -> vector<2x256xf32>
    %221 = arith.addf %217, %220 : vector<2x256xf32>
    %222 = arith.negf %221 : vector<2x256xf32>
    %223 = math.exp %222 : vector<2x256xf32>
    %cst_132 = arith.constant 1.000000e+00 : f32
    %224 = vector.broadcast %cst_132 : f32 to vector<2x256xf32>
    %225 = arith.addf %224, %223 : vector<2x256xf32>
    %226 = arith.divf %224, %225 : vector<2x256xf32>
    %227 = math.tanh %221 : vector<2x256xf32>
    %228 = vector.extract_strided_slice %226 {offsets = [0, 0], sizes = [2, 64], strides = [1, 1]} : vector<2x256xf32> to vector<2x64xf32>
    %229 = vector.extract_strided_slice %226 {offsets = [0, 64], sizes = [2, 64], strides = [1, 1]} : vector<2x256xf32> to vector<2x64xf32>
    %230 = vector.extract_strided_slice %227 {offsets = [0, 128], sizes = [2, 64], strides = [1, 1]} : vector<2x256xf32> to vector<2x64xf32>
    %231 = vector.extract_strided_slice %226 {offsets = [0, 192], sizes = [2, 64], strides = [1, 1]} : vector<2x256xf32> to vector<2x64xf32>
    %c0_133 = arith.constant 0 : index
    %c0_134 = arith.constant 0 : index
    %232 = vector.load %arg10[%c0_133, %c0_134] : memref<2x64xf32, #tpu.memory_space<vmem>>, vector<2x64xf32>
    %233 = arith.mulf %229, %232 : vector<2x64xf32>
    %234 = arith.mulf %228, %230 : vector<2x64xf32>
    %235 = arith.addf %233, %234 : vector<2x64xf32>
    %236 = math.tanh %235 : vector<2x64xf32>
    %237 = arith.mulf %231, %236 : vector<2x64xf32>
    %c0_135 = arith.constant 0 : index
    %c0_136 = arith.constant 0 : index
    %238 = vector.load %arg10[%c0_135, %c0_136] : memref<2x64xf32, #tpu.memory_space<vmem>>, vector<2x64xf32>
    tpu.vector_store %arg10[%c0_135, %c0_136], %235 {strides = array<i32>} : memref<2x64xf32, #tpu.memory_space<vmem>>, vector<2x64xf32>,
    %c0_137 = arith.constant 0 : index
    %c0_138 = arith.constant 0 : index
    %239 = vector.load %arg9[%c0_137, %c0_138] : memref<2x64xf32, #tpu.memory_space<vmem>>, vector<2x64xf32>
    tpu.vector_store %arg9[%c0_137, %c0_138], %237 {strides = array<i32>} : memref<2x64xf32, #tpu.memory_space<vmem>>, vector<2x64xf32>,
    %240 = vector.extract_strided_slice %237 {offsets = [0, 0], sizes = [2, 32], strides = [1, 1]} : vector<2x64xf32> to vector<2x32xf32>
    %c2_i32_139 = arith.constant 2 : i32
    %241 = arith.muli %c6_i32, %c2_i32_139 : i32
    %242 = arith.index_cast %241 : i32 to index
    %c0_140 = arith.constant 0 : index
    %243 = vector.load %arg8[%242, %c0_140] : memref<16x64xf32, #tpu.memory_space<vmem>>, vector<2x32xf32>
    tpu.vector_store %arg8[%242, %c0_140], %240 {strides = array<i32>} : memref<16x64xf32, #tpu.memory_space<vmem>>, vector<2x32xf32>,
    %244 = vector.extract_strided_slice %237 {offsets = [0, 32], sizes = [2, 32], strides = [1, 1]} : vector<2x64xf32> to vector<2x32xf32>
    %c7_i32_141 = arith.constant 7 : i32
    %245 = arith.subi %c7_i32_141, %c6_i32 : i32
    %c2_i32_142 = arith.constant 2 : i32
    %246 = arith.muli %245, %c2_i32_142 : i32
    %247 = arith.index_cast %246 : i32 to index
    %c32_143 = arith.constant 32 : index
    %248 = vector.load %arg8[%247, %c32_143] : memref<16x64xf32, #tpu.memory_space<vmem>>, vector<2x32xf32>
    tpu.vector_store %arg8[%247, %c32_143], %244 {strides = array<i32>} : memref<16x64xf32, #tpu.memory_space<vmem>>, vector<2x32xf32>,
    %c7_i32_144 = arith.constant 7 : i32
    %c2_i32_145 = arith.constant 2 : i32
    %249 = arith.muli %c7_i32_144, %c2_i32_145 : i32
    %250 = arith.index_cast %249 : i32 to index
    %c0_146 = arith.constant 0 : index
    %251 = vector.load %arg7[%250, %c0_146] : memref<16x256xf32, #tpu.memory_space<vmem>>, vector<2x256xf32>
    %c0_147 = arith.constant 0 : index
    %c0_148 = arith.constant 0 : index
    %252 = vector.load %arg9[%c0_147, %c0_148] : memref<2x64xf32, #tpu.memory_space<vmem>>, vector<2x64xf32>
    %c0_149 = arith.constant 0 : index
    %c0_150 = arith.constant 0 : index
    %253 = vector.load %arg3[%c0_149, %c0_150] : memref<64x256xf32, #tpu.memory_space<vmem>>, vector<64x256xf32>
    %cst_151 = arith.constant dense<0.000000e+00> : vector<2x256xf32>
    %254 = tpu.matmul %252, %253, %cst_151 {dimension_numbers = #tpu.dot_dimension_numbers<[1], [0], [0], [1], [0, 0, 1, 1], [], []>} : vector<2x64xf32>, vector<64x256xf32>, vector<2x256xf32> -> vector<2x256xf32>
    %255 = arith.addf %251, %254 : vector<2x256xf32>
    %256 = arith.negf %255 : vector<2x256xf32>
    %257 = math.exp %256 : vector<2x256xf32>
    %cst_152 = arith.constant 1.000000e+00 : f32
    %258 = vector.broadcast %cst_152 : f32 to vector<2x256xf32>
    %259 = arith.addf %258, %257 : vector<2x256xf32>
    %260 = arith.divf %258, %259 : vector<2x256xf32>
    %261 = math.tanh %255 : vector<2x256xf32>
    %262 = vector.extract_strided_slice %260 {offsets = [0, 0], sizes = [2, 64], strides = [1, 1]} : vector<2x256xf32> to vector<2x64xf32>
    %263 = vector.extract_strided_slice %260 {offsets = [0, 64], sizes = [2, 64], strides = [1, 1]} : vector<2x256xf32> to vector<2x64xf32>
    %264 = vector.extract_strided_slice %261 {offsets = [0, 128], sizes = [2, 64], strides = [1, 1]} : vector<2x256xf32> to vector<2x64xf32>
    %265 = vector.extract_strided_slice %260 {offsets = [0, 192], sizes = [2, 64], strides = [1, 1]} : vector<2x256xf32> to vector<2x64xf32>
    %c0_153 = arith.constant 0 : index
    %c0_154 = arith.constant 0 : index
    %266 = vector.load %arg10[%c0_153, %c0_154] : memref<2x64xf32, #tpu.memory_space<vmem>>, vector<2x64xf32>
    %267 = arith.mulf %263, %266 : vector<2x64xf32>
    %268 = arith.mulf %262, %264 : vector<2x64xf32>
    %269 = arith.addf %267, %268 : vector<2x64xf32>
    %270 = math.tanh %269 : vector<2x64xf32>
    %271 = arith.mulf %265, %270 : vector<2x64xf32>
    %c0_155 = arith.constant 0 : index
    %c0_156 = arith.constant 0 : index
    %272 = vector.load %arg10[%c0_155, %c0_156] : memref<2x64xf32, #tpu.memory_space<vmem>>, vector<2x64xf32>
    tpu.vector_store %arg10[%c0_155, %c0_156], %269 {strides = array<i32>} : memref<2x64xf32, #tpu.memory_space<vmem>>, vector<2x64xf32>,
    %c0_157 = arith.constant 0 : index
    %c0_158 = arith.constant 0 : index
    %273 = vector.load %arg9[%c0_157, %c0_158] : memref<2x64xf32, #tpu.memory_space<vmem>>, vector<2x64xf32>
    tpu.vector_store %arg9[%c0_157, %c0_158], %271 {strides = array<i32>} : memref<2x64xf32, #tpu.memory_space<vmem>>, vector<2x64xf32>,
    %274 = vector.extract_strided_slice %271 {offsets = [0, 0], sizes = [2, 32], strides = [1, 1]} : vector<2x64xf32> to vector<2x32xf32>
    %c2_i32_159 = arith.constant 2 : i32
    %275 = arith.muli %c7_i32_144, %c2_i32_159 : i32
    %276 = arith.index_cast %275 : i32 to index
    %c0_160 = arith.constant 0 : index
    %277 = vector.load %arg8[%276, %c0_160] : memref<16x64xf32, #tpu.memory_space<vmem>>, vector<2x32xf32>
    tpu.vector_store %arg8[%276, %c0_160], %274 {strides = array<i32>} : memref<16x64xf32, #tpu.memory_space<vmem>>, vector<2x32xf32>,
    %278 = vector.extract_strided_slice %271 {offsets = [0, 32], sizes = [2, 32], strides = [1, 1]} : vector<2x64xf32> to vector<2x32xf32>
    %c7_i32_161 = arith.constant 7 : i32
    %279 = arith.subi %c7_i32_161, %c7_i32_144 : i32
    %c2_i32_162 = arith.constant 2 : i32
    %280 = arith.muli %279, %c2_i32_162 : i32
    %281 = arith.index_cast %280 : i32 to index
    %c32_163 = arith.constant 32 : index
    %282 = vector.load %arg8[%281, %c32_163] : memref<16x64xf32, #tpu.memory_space<vmem>>, vector<2x32xf32>
    tpu.vector_store %arg8[%281, %c32_163], %278 {strides = array<i32>} : memref<16x64xf32, #tpu.memory_space<vmem>>, vector<2x32xf32>,
    %c8_i32 = arith.constant 8 : i32
    %c0_164 = arith.constant 0 : index
    %c0_165 = arith.constant 0 : index
    %283 = vector.load %arg8[%c0_164, %c0_165] : memref<16x64xf32, #tpu.memory_space<vmem>>, vector<16x64xf32>
    %c0_166 = arith.constant 0 : index
    %c0_167 = arith.constant 0 : index
    %284 = vector.load %arg4[%c0_166, %c0_167] : memref<64x128xf32, #tpu.memory_space<vmem>>, vector<64x128xf32>
    %cst_168 = arith.constant dense<0.000000e+00> : vector<16x128xf32>
    %285 = tpu.matmul %283, %284, %cst_168 {dimension_numbers = #tpu.dot_dimension_numbers<[1], [0], [0], [1], [0, 0, 1, 1], [], []>} : vector<16x64xf32>, vector<64x128xf32>, vector<16x128xf32> -> vector<16x128xf32>
    %c0_169 = arith.constant 0 : index
    %c0_170 = arith.constant 0 : index
    %286 = vector.load %arg5[%c0_169, %c0_170] : memref<1x128xf32, #tpu.memory_space<vmem>>, vector<1x128xf32>
    %287 = vector.broadcast %286 : vector<1x128xf32> to vector<16x128xf32>
    %288 = arith.addf %285, %287 : vector<16x128xf32>
    %c0_171 = arith.constant 0 : index
    %c0_172 = arith.constant 0 : index
    %289 = vector.load %arg6[%c0_171, %c0_172] : memref<16x128xf32, #tpu.memory_space<vmem>>, vector<16x128xf32>
    tpu.vector_store %arg6[%c0_171, %c0_172], %288 {strides = array<i32>} : memref<16x128xf32, #tpu.memory_space<vmem>>, vector<16x128xf32>,
    return
  }
}

</mosaic_0001>

<llo_original>
// kernel: ner_forward.1
$region0: #{ner_forward.1}
  #allocation0 [shape = 'u32[]', space=smem, size = 0x4, offset = 0x4, fixed_abs, tag = 'smem constant byte address 0x4 - core index']
  #allocation1 [shape = 'u32[144,128]{1,0:T(1,128)}', space=vmem, size = 0x12000, scoped, tag = 'internal scratch']
  #allocation2 [shape = 'f32[16,256]{1,0:T(8,128)}', space=vmem, size = 0x4000, scoped, tag = 'scratch operand']
  #allocation3 [shape = 'f32[16,64]{1,0:T(8,128)}', space=vmem, size = 0x2000, scoped, tag = 'scratch operand']
  #allocation4 [shape = 'f32[2,64]{1,0:T(2,128)}', space=vmem, size = 0x400, scoped, tag = 'scratch operand']
  #allocation5 [shape = 'f32[2,64]{1,0:T(2,128)}', space=vmem, size = 0x400, scoped, tag = 'scratch operand']
  %s0 = inlined_call_operand.vmem [shape: f32[16,64], index: 0, kind: input, shape index: {}]
  %s1 = inlined_call_operand.vmem [shape: f32[64,256], index: 1, kind: input, shape index: {}]
  %s2 = inlined_call_operand.vmem [shape: f32[1,256], index: 2, kind: input, shape index: {}]
  %s3 = inlined_call_operand.vmem [shape: f32[64,256], index: 3, kind: input, shape index: {}]
  %s4 = inlined_call_operand.vmem [shape: f32[64,128], index: 4, kind: input, shape index: {}]
  %s5 = inlined_call_operand.vmem [shape: f32[1,128], index: 5, kind: input, shape index: {}]
  %s6 = inlined_call_operand.vmem [shape: f32[16,128], index: 6, kind: output, shape index: {}]
  %s7 = sld [smem:[#allocation0]]
  $region34: #{ner_forward.1} parent=0
    _
  %s9 = ssub.s32 1, %s7
  %s10 = scalar_select 0, %s9, %s7
  // Predicated region
  $region2: #{ner_forward.1} parent=0 // pred_check
    _
  $region3: #{ner_forward.1} parent=0 // pred_check_branch
    %12 = sbr.rel (0) target = $region5
  $region4: #{ner_forward.1} parent=0 // pred_region
    _
  $region5: #{ner_forward.1} parent=0 // pred_fallthru
    _
  // Predicated region
  $region6: #{ner_forward.1} parent=0 // pred_check
    _
  $region7: #{ner_forward.1} parent=0 // pred_check_branch
    %14 = sbr.rel (0) target = $region9
  $region8: #{ner_forward.1} parent=0 // pred_region
    _
  $region9: #{ner_forward.1} parent=0 // pred_fallthru
    _
  // Predicated region
  $region10: #{ner_forward.1} parent=0 // pred_check
    _
  $region11: #{ner_forward.1} parent=0 // pred_check_branch
    %16 = sbr.rel (0) target = $region13
  $region12: #{ner_forward.1} parent=0 // pred_region
    _
  $region13: #{ner_forward.1} parent=0 // pred_fallthru
    _
  // Predicated region
  $region14: #{ner_forward.1} parent=0 // pred_check
    _
  $region15: #{ner_forward.1} parent=0 // pred_check_branch
    %18 = sbr.rel (0) target = $region17
  $region16: #{ner_forward.1} parent=0 // pred_region
    _
  $region17: #{ner_forward.1} parent=0 // pred_fallthru
    _
  // Predicated region
  $region18: #{ner_forward.1} parent=0 // pred_check
    _
  $region19: #{ner_forward.1} parent=0 // pred_check_branch
    %20 = sbr.rel (0) target = $region21
  $region20: #{ner_forward.1} parent=0 // pred_region
    _
  $region21: #{ner_forward.1} parent=0 // pred_fallthru
    _
  // Predicated region
  $region22: #{ner_forward.1} parent=0 // pred_check
    _
  $region23: #{ner_forward.1} parent=0 // pred_check_branch
    %22 = sbr.rel (0) target = $region25
  $region24: #{ner_forward.1} parent=0 // pred_region
    _
  $region25: #{ner_forward.1} parent=0 // pred_fallthru
    _
  %v23 = vld [vmem:[%s0] sm:$0xff]
  %v24 = vld [vmem:[%s0 + $0x8] sm:$0xff]
  %v25 = vld [vmem:[%s1] sm:$0xff]
  %v26 = vld [vmem:[%s1 + $0x8] sm:$0xff]
  %v27 = vld [vmem:[%s1 + $0x10] sm:$0xff]
  %v28 = vld [vmem:[%s1 + $0x18] sm:$0xff]
  %v29 = vld [vmem:[%s1 + $0x20] sm:$0xff]
  %v30 = vld [vmem:[%s1 + $0x28] sm:$0xff]
  %v31 = vld [vmem:[%s1 + $0x30] sm:$0xff]
  %v32 = vld [vmem:[%s1 + $0x38] sm:$0xff]
  %v33 = vld [vmem:[%s1 + $0x40] sm:$0xff]
  %v34 = vld [vmem:[%s1 + $0x48] sm:$0xff]
  %v35 = vld [vmem:[%s1 + $0x50] sm:$0xff]
  %v36 = vld [vmem:[%s1 + $0x58] sm:$0xff]
  %v37 = vld [vmem:[%s1 + $0x60] sm:$0xff]
  %v38 = vld [vmem:[%s1 + $0x68] sm:$0xff]
  %v39 = vld [vmem:[%s1 + $0x70] sm:$0xff]
  %v40 = vld [vmem:[%s1 + $0x78] sm:$0xff]
  %v41 = vld [vmem:[%s2] sm:$0x3]
  %v43 = vlaneseq
  %v44 = vshrl.u32 %v43, 7
  %v45 = vsub.s32 0, %v44
  %v46 = vrot.slane %v41, %v45
  %v47 = vlaneseq
  %v48 = vshrl.u32 %v47, 7
  %v49 = vsub.s32 1, %v48
  %v50 = vrot.slane %v41, %v49
  %vm53 = vcmask 523264
  %v55 = vsel %vm53, %v23, 0
  %v58 = vsel %vm53, %v24, 0
  %60 = vmatprep.subr.mxu0 %v26
  %61 = vmatpush1.msra.mxu0 %v25
  %62 = vmatprep.subr.mxu0 %v28
  %63 = vmatpush1.msra.mxu0 %v27
  %64 = vmatprep.subr.mxu0 %v30
  %65 = vmatpush1.msra.mxu0 %v29
  %66 = vmatprep.subr.mxu0 %v32
  %67 = vmatpush1.msra.mxu0 %v31
  %68 = vmatprep.subr.mxu0 %v34
  %69 = vmatpush1.msra.mxu0 %v33
  %70 = vmatprep.subr.mxu0 %v36
  %71 = vmatpush1.msra.mxu0 %v35
  %72 = vmatprep.subr.mxu0 %v38
  %73 = vmatpush1.msra.mxu0 %v37
  %74 = vmatprep.subr.mxu0 %v40
  %75 = vmatpush1.msra.mxu0 %v39
  %76 = vmatprep.subr.mxu0 0.0
  %77 = vmatpush1.msra.mxu0 0.0
  %78 = vmatprep.subr.mxu0 0.0
  %79 = vmatpush1.msra.mxu0 0.0
  %80 = vmatprep.subr.mxu0 0.0
  %81 = vmatpush1.msra.mxu0 0.0
  %82 = vmatprep.subr.mxu0 0.0
  %83 = vmatpush1.msra.mxu0 0.0
  %84 = vmatprep.subr.mxu0 0.0
  %85 = vmatpush1.msra.mxu0 0.0
  %86 = vmatprep.subr.mxu0 0.0
  %87 = vmatpush1.msra.mxu0 0.0
  %88 = vmatprep.subr.mxu0 0.0
  %89 = vmatpush1.msra.mxu0 0.0
  %90 = vmatprep.subr.mxu0 0.0
  %91 = vmatpush1.msra.mxu0 0.0
  %92 = vmatprep.subr.mxu0 0.0
  %93 = vmatpush1.msra.mxu0 0.0
  %94 = vmatprep.subr.mxu0 0.0
  %95 = vmatpush1.msra.mxu0 0.0
  %96 = vmatprep.subr.mxu0 0.0
  %97 = vmatpush1.msra.mxu0 0.0
  %98 = vmatprep.subr.mxu0 0.0
  %99 = vmatpush1.msra.mxu0 0.0
  %100 = vmatprep.subr.mxu0 0.0
  %101 = vmatpush1.msra.mxu0 0.0
  %102 = vmatprep.subr.mxu0 0.0
  %103 = vmatpush1.msra.mxu0 0.0
  %104 = vmatprep.subr.mxu0 0.0
  %105 = vmatpush1.msra.mxu0 0.0
  %106 = vmatprep.subr.mxu0 0.0
  %107 = vmatpush1.msra.mxu0 0.0
  %108 = vmatprep.subr.mxu0 0.0
  %109 = vmatpush1.msra.mxu0 0.0
  %110 = vmatprep.subr.mxu0 0.0
  %111 = vmatpush1.msra.mxu0 0.0
  %112 = vmatprep.subr.mxu0 0.0
  %113 = vmatpush1.msra.mxu0 0.0
  %114 = vmatprep.subr.mxu0 0.0
  %115 = vmatpush1.msra.mxu0 0.0
  %116 = vmatprep.subr.mxu0 0.0
  %117 = vmatpush1.msra.mxu0 0.0
  %118 = vmatprep.subr.mxu0 0.0
  %119 = vmatpush1.msra.mxu0 0.0
  %120 = vmatprep.subr.mxu0 0.0
  %121 = vmatpush1.msra.mxu0 0.0
  %122 = vmatprep.subr.mxu0 0.0
  %123 = vmatpush1.msra.mxu0 0.0
  %124 = vmatprep.mubr.f32.mxu0 0.0
  %125 = vmatmul.mubr.f32.gmra.mrb[0].mxu0 %v55
  %v126 = vpop.f32.mrb[0].mxu0
  %v127 = vadd.f32 %v46, %v126
  %v128 = vpop.f32.mrb[0].mxu0
  %v129 = vadd.f32 %v50, %v128
  %130 = vmatprep.mubr.f32.mxu0 0.0
  %131 = vmatmul.mubr.f32.gmra.mrb[0].mxu0 %v58
  %v132 = vpop.f32.mrb[0].mxu0
  %v133 = vadd.f32 %v46, %v132
  %v134 = vpop.f32.mrb[0].mxu0
  %v135 = vadd.f32 %v50, %v134
  %136 = vdwg.mxu0
  %137 = vst [vmem:[#allocation2] sm:$0xff] %v127
  %138 = vst [vmem:[#allocation2 + $0x8] sm:$0xff] %v129
  %139 = vst [vmem:[#allocation2 + $0x10] sm:$0xff] %v133
  %140 = vst [vmem:[#allocation2 + $0x18] sm:$0xff] %v135
  %vm141 = vcmask 517120
  %142 = vst.msk [vmem:[#allocation4] sm:$0x3] %vm141, 0.0
  %143 = vst.msk [vmem:[#allocation5] sm:$0x3] %vm141, 0.0
  %v144 = vld [vmem:[#allocation2] sm:$0x3]
  %v145 = vld [vmem:[#allocation2 + $0x8] sm:$0x3]
  %v146 = vld [vmem:[#allocation4] sm:$0x3]
  %v147 = vld [vmem:[%s3] sm:$0xff]
  %v148 = vld [vmem:[%s3 + $0x8] sm:$0xff]
  %v149 = vld [vmem:[%s3 + $0x10] sm:$0xff]
  %v150 = vld [vmem:[%s3 + $0x18] sm:$0xff]
  %v151 = vld [vmem:[%s3 + $0x20] sm:$0xff]
  %v152 = vld [vmem:[%s3 + $0x28] sm:$0xff]
  %v153 = vld [vmem:[%s3 + $0x30] sm:$0xff]
  %v154 = vld [vmem:[%s3 + $0x38] sm:$0xff]
  %v155 = vld [vmem:[%s3 + $0x40] sm:$0xff]
  %v156 = vld [vmem:[%s3 + $0x48] sm:$0xff]
  %v157 = vld [vmem:[%s3 + $0x50] sm:$0xff]
  %v158 = vld [vmem:[%s3 + $0x58] sm:$0xff]
  %v159 = vld [vmem:[%s3 + $0x60] sm:$0xff]
  %v160 = vld [vmem:[%s3 + $0x68] sm:$0xff]
  %v161 = vld [vmem:[%s3 + $0x70] sm:$0xff]
  %v162 = vld [vmem:[%s3 + $0x78] sm:$0xff]
  %v164 = vsel %vm53, %v146, 0
  %166 = vmatprep.subr.mxu0 %v148
  %167 = vmatpush1.msra.mxu0 %v147
  %168 = vmatprep.subr.mxu0 %v150
  %169 = vmatpush1.msra.mxu0 %v149
  %170 = vmatprep.subr.mxu0 %v152
  %171 = vmatpush1.msra.mxu0 %v151
  %172 = vmatprep.subr.mxu0 %v154
  %173 = vmatpush1.msra.mxu0 %v153
  %174 = vmatprep.subr.mxu0 %v156
  %175 = vmatpush1.msra.mxu0 %v155
  %176 = vmatprep.subr.mxu0 %v158
  %177 = vmatpush1.msra.mxu0 %v157
  %178 = vmatprep.subr.mxu0 %v160
  %179 = vmatpush1.msra.mxu0 %v159
  %180 = vmatprep.subr.mxu0 %v162
  %181 = vmatpush1.msra.mxu0 %v161
  %182 = vmatprep.subr.mxu0 0.0
  %183 = vmatpush1.msra.mxu0 0.0
  %184 = vmatprep.subr.mxu0 0.0
  %185 = vmatpush1.msra.mxu0 0.0
  %186 = vmatprep.subr.mxu0 0.0
  %187 = vmatpush1.msra.mxu0 0.0
  %188 = vmatprep.subr.mxu0 0.0
  %189 = vmatpush1.msra.mxu0 0.0
  %190 = vmatprep.subr.mxu0 0.0
  %191 = vmatpush1.msra.mxu0 0.0
  %192 = vmatprep.subr.mxu0 0.0
  %193 = vmatpush1.msra.mxu0 0.0
  %194 = vmatprep.subr.mxu0 0.0
  %195 = vmatpush1.msra.mxu0 0.0
  %196 = vmatprep.subr.mxu0 0.0
  %197 = vmatpush1.msra.mxu0 0.0
  %198 = vmatprep.subr.mxu0 0.0
  %199 = vmatpush1.msra.mxu0 0.0
  %200 = vmatprep.subr.mxu0 0.0
  %201 = vmatpush1.msra.mxu0 0.0
  %202 = vmatprep.subr.mxu0 0.0
  %203 = vmatpush1.msra.mxu0 0.0
  %204 = vmatprep.subr.mxu0 0.0
  %205 = vmatpush1.msra.mxu0 0.0
  %206 = vmatprep.subr.mxu0 0.0
  %207 = vmatpush1.msra.mxu0 0.0
  %208 = vmatprep.subr.mxu0 0.0
  %209 = vmatpush1.msra.mxu0 0.0
  %210 = vmatprep.subr.mxu0 0.0
  %211 = vmatpush1.msra.mxu0 0.0
  %212 = vmatprep.subr.mxu0 0.0
  %213 = vmatpush1.msra.mxu0 0.0
  %214 = vmatprep.subr.mxu0 0.0
  %215 = vmatpush1.msra.mxu0 0.0
  %216 = vmatprep.subr.mxu0 0.0
  %217 = vmatpush1.msra.mxu0 0.0
  %218 = vmatprep.subr.mxu0 0.0
  %219 = vmatpush1.msra.mxu0 0.0
  %220 = vmatprep.subr.mxu0 0.0
  %221 = vmatpush1.msra.mxu0 0.0
  %222 = vmatprep.subr.mxu0 0.0
  %223 = vmatpush1.msra.mxu0 0.0
  %224 = vmatprep.subr.mxu0 0.0
  %225 = vmatpush1.msra.mxu0 0.0
  %226 = vmatprep.subr.mxu0 0.0
  %227 = vmatpush1.msra.mxu0 0.0
  %228 = vmatprep.subr.mxu0 0.0
  %229 = vmatpush1.msra.mxu0 0.0
  %230 = vmatprep.mubr.f32.mxu0 0.0
  %231 = vmatmul.mubr.f32.gmra.mrb[0].mxu0 %v164
  %v232 = vpop.f32.mrb[0].mxu0
  %v233 = vadd.f32 0.0, %v232
  %v234 = vpop.f32.mrb[0].mxu0
  %v235 = vadd.f32 0.0, %v234
  %236 = vdwg.mxu0
  %v237 = vadd.f32 %v144, %v233
  %v238 = vadd.f32 %v145, %v235
  %v239 = vxor.u32 %v237, 2147483648
  %v240 = vxor.u32 %v238, 2147483648
  %v241 = vmul.f32 %v239, 1.442695
  %v242 = vpow.pop %v241
  %v243 = vmul.f32 %v240, 1.442695
  %v244 = vpow.pop %v243
  %v245 = vadd.f32 %v242, 1.0
  %v246 = vadd.f32 %v244, 1.0
  %v247 = vrcp.pop %v245
  %v248 = vmul.f32 1.0, %v247
  %v249 = vrcp.pop %v246
  %v250 = vmul.f32 1.0, %v249
  %v251 = vtanh.pop %v238
  %v252 = vld [vmem:[#allocation5] sm:$0x3]
  %254 = vrot.lane.b32.xlu0 %v252, 64
  %v255 = vpop.permute.xlu0 %254
  %v257 = vmul.f32 %v248, %v255
  %v258 = vmul.f32 %v248, %v251
  %260 = vrot.lane.b32.xlu0 %v258, 64
  %v261 = vpop.permute.xlu0 %260
  %v263 = vadd.f32 %v257, %v261
  %v264 = vtanh.pop %v263
  %v265 = vmul.f32 %v250, %v264
  %267 = vrot.lane.b32.xlu0 %v263, 64
  %v268 = vpop.permute.xlu0 %267
  %270 = vst.msk [vmem:[#allocation5] sm:$0x3] %vm141, %v268
  %272 = vrot.lane.b32.xlu0 %v265, 64
  %v273 = vpop.permute.xlu0 %272
  %275 = vst.msk [vmem:[#allocation4] sm:$0x3] %vm141, %v273
  %vm276 = vcmask 254976
  %277 = vst.msk [vmem:[#allocation3] sm:$0x3] %vm276, %v273
  %vm278 = vcmask 517376
  %279 = vst.msk [vmem:[#allocation3 + $0xe] sm:$0x3] %vm278, %v273
  %v280 = vld [vmem:[#allocation2] sm:$0xc]
  %v281 = vld [vmem:[#allocation2 + $0x8] sm:$0xc]
  %v282 = vld [vmem:[#allocation4] sm:$0x3]
  %v283 = vld [vmem:[%s3] sm:$0xff]
  %v284 = vld [vmem:[%s3 + $0x8] sm:$0xff]
  %v285 = vld [vmem:[%s3 + $0x10] sm:$0xff]
  %v286 = vld [vmem:[%s3 + $0x18] sm:$0xff]
  %v287 = vld [vmem:[%s3 + $0x20] sm:$0xff]
  %v288 = vld [vmem:[%s3 + $0x28] sm:$0xff]
  %v289 = vld [vmem:[%s3 + $0x30] sm:$0xff]
  %v290 = vld [vmem:[%s3 + $0x38] sm:$0xff]
  %v291 = vld [vmem:[%s3 + $0x40] sm:$0xff]
  %v292 = vld [vmem:[%s3 + $0x48] sm:$0xff]
  %v293 = vld [vmem:[%s3 + $0x50] sm:$0xff]
  %v294 = vld [vmem:[%s3 + $0x58] sm:$0xff]
  %v295 = vld [vmem:[%s3 + $0x60] sm:$0xff]
  %v296 = vld [vmem:[%s3 + $0x68] sm:$0xff]
  %v297 = vld [vmem:[%s3 + $0x70] sm:$0xff]
  %v298 = vld [vmem:[%s3 + $0x78] sm:$0xff]
  %v300 = vsel %vm53, %v282, 0
  %302 = vmatprep.subr.mxu0 %v284
  %303 = vmatpush1.msra.mxu0 %v283
  %304 = vmatprep.subr.mxu0 %v286
  %305 = vmatpush1.msra.mxu0 %v285
  %306 = vmatprep.subr.mxu0 %v288
  %307 = vmatpush1.msra.mxu0 %v287
  %308 = vmatprep.subr.mxu0 %v290
  %309 = vmatpush1.msra.mxu0 %v289
  %310 = vmatprep.subr.mxu0 %v292
  %311 = vmatpush1.msra.mxu0 %v291
  %312 = vmatprep.subr.mxu0 %v294
  %313 = vmatpush1.msra.mxu0 %v293
  %314 = vmatprep.subr.mxu0 %v296
  %315 = vmatpush1.msra.mxu0 %v295
  %316 = vmatprep.subr.mxu0 %v298
  %317 = vmatpush1.msra.mxu0 %v297
  %318 = vmatprep.subr.mxu0 0.0
  %319 = vmatpush1.msra.mxu0 0.0
  %320 = vmatprep.subr.mxu0 0.0
  %321 = vmatpush1.msra.mxu0 0.0
  %322 = vmatprep.subr.mxu0 0.0
  %323 = vmatpush1.msra.mxu0 0.0
  %324 = vmatprep.subr.mxu0 0.0
  %325 = vmatpush1.msra.mxu0 0.0
  %326 = vmatprep.subr.mxu0 0.0
  %327 = vmatpush1.msra.mxu0 0.0
  %328 = vmatprep.subr.mxu0 0.0
  %329 = vmatpush1.msra.mxu0 0.0
  %330 = vmatprep.subr.mxu0 0.0
  %331 = vmatpush1.msra.mxu0 0.0
  %332 = vmatprep.subr.mxu0 0.0
  %333 = vmatpush1.msra.mxu0 0.0
  %334 = vmatprep.subr.mxu0 0.0
  %335 = vmatpush1.msra.mxu0 0.0
  %336 = vmatprep.subr.mxu0 0.0
  %337 = vmatpush1.msra.mxu0 0.0
  %338 = vmatprep.subr.mxu0 0.0
  %339 = vmatpush1.msra.mxu0 0.0
  %340 = vmatprep.subr.mxu0 0.0
  %341 = vmatpush1.msra.mxu0 0.0
  %342 = vmatprep.subr.mxu0 0.0
  %343 = vmatpush1.msra.mxu0 0.0
  %344 = vmatprep.subr.mxu0 0.0
  %345 = vmatpush1.msra.mxu0 0.0
  %346 = vmatprep.subr.mxu0 0.0
  %347 = vmatpush1.msra.mxu0 0.0
  %348 = vmatprep.subr.mxu0 0.0
  %349 = vmatpush1.msra.mxu0 0.0
  %350 = vmatprep.subr.mxu0 0.0
  %351 = vmatpush1.msra.mxu0 0.0
  %352 = vmatprep.subr.mxu0 0.0
  %353 = vmatpush1.msra.mxu0 0.0
  %354 = vmatprep.subr.mxu0 0.0
  %355 = vmatpush1.msra.mxu0 0.0
  %356 = vmatprep.subr.mxu0 0.0
  %357 = vmatpush1.msra.mxu0 0.0
  %358 = vmatprep.subr.mxu0 0.0
  %359 = vmatpush1.msra.mxu0 0.0
  %360 = vmatprep.subr.mxu0 0.0
  %361 = vmatpush1.msra.mxu0 0.0
  %362 = vmatprep.subr.mxu0 0.0
  %363 = vmatpush1.msra.mxu0 0.0
  %364 = vmatprep.subr.mxu0 0.0
  %365 = vmatpush1.msra.mxu0 0.0
  %366 = vmatprep.mubr.f32.mxu0 0.0
  %367 = vmatmul.mubr.f32.gmra.mrb[0].mxu0 %v300
  %v368 = vpop.f32.mrb[0].mxu0
  %v369 = vadd.f32 0.0, %v368
  %v370 = vpop.f32.mrb[0].mxu0
  %v371 = vadd.f32 0.0, %v370
  %372 = vdwg.mxu0
  %v375 = vrot.slane %v369, 6
  %v376 = vrot.slane %v371, 6
  %v379 = vadd.f32 %v280, %v375
  %v380 = vadd.f32 %v281, %v376
  %v381 = vxor.u32 %v379, 2147483648
  %v382 = vxor.u32 %v380, 2147483648
  %v383 = vmul.f32 %v381, 1.442695
  %v384 = vpow.pop %v383
  %v385 = vmul.f32 %v382, 1.442695
  %v386 = vpow.pop %v385
  %v387 = vadd.f32 %v384, 1.0
  %v388 = vadd.f32 %v386, 1.0
  %v389 = vrcp.pop %v387
  %v390 = vmul.f32 1.0, %v389
  %v391 = vrcp.pop %v388
  %v392 = vmul.f32 1.0, %v391
  %v393 = vtanh.pop %v380
  %v394 = vld [vmem:[#allocation5] sm:$0x3]
  %v396 = vrot.slane %v394, 6
  %397 = vrot.lane.b32.xlu0 %v396, 64
  %v398 = vpop.permute.xlu0 %397
  %v400 = vmul.f32 %v390, %v398
  %v401 = vmul.f32 %v390, %v393
  %403 = vrot.lane.b32.xlu0 %v401, 64
  %v404 = vpop.permute.xlu0 %403
  %v406 = vadd.f32 %v400, %v404
  %v407 = vtanh.pop %v406
  %v408 = vmul.f32 %v392, %v407
  %410 = vrot.lane.b32.xlu0 %v406, 64
  %v411 = vpop.permute.xlu0 %410
  %vm413 = vcmask 519170
  %414 = vst.msk [vmem:[#allocation5 - $0x2] sm:$0xc] %vm413, %v411
  %416 = vrot.lane.b32.xlu0 %v408, 64
  %v417 = vpop.permute.xlu0 %416
  %419 = vst.msk [vmem:[#allocation4 - $0x2] sm:$0xc] %vm413, %v417
  %vm420 = vcmask 257026
  %421 = vst.msk [vmem:[#allocation3] sm:$0xc] %vm420, %v417
  %vm422 = vcmask 519426
  %423 = vst.msk [vmem:[#allocation3 + $0xa] sm:$0xc] %vm422, %v417
  %v424 = vld [vmem:[#allocation2] sm:$0x30]
  %v425 = vld [vmem:[#allocation2 + $0x8] sm:$0x30]
  %v426 = vld [vmem:[#allocation4] sm:$0x3]
  %v427 = vld [vmem:[%s3] sm:$0xff]
  %v428 = vld [vmem:[%s3 + $0x8] sm:$0xff]
  %v429 = vld [vmem:[%s3 + $0x10] sm:$0xff]
  %v430 = vld [vmem:[%s3 + $0x18] sm:$0xff]
  %v431 = vld [vmem:[%s3 + $0x20] sm:$0xff]
  %v432 = vld [vmem:[%s3 + $0x28] sm:$0xff]
  %v433 = vld [vmem:[%s3 + $0x30] sm:$0xff]
  %v434 = vld [vmem:[%s3 + $0x38] sm:$0xff]
  %v435 = vld [vmem:[%s3 + $0x40] sm:$0xff]
  %v436 = vld [vmem:[%s3 + $0x48] sm:$0xff]
  %v437 = vld [vmem:[%s3 + $0x50] sm:$0xff]
  %v438 = vld [vmem:[%s3 + $0x58] sm:$0xff]
  %v439 = vld [vmem:[%s3 + $0x60] sm:$0xff]
  %v440 = vld [vmem:[%s3 + $0x68] sm:$0xff]
  %v441 = vld [vmem:[%s3 + $0x70] sm:$0xff]
  %v442 = vld [vmem:[%s3 + $0x78] sm:$0xff]
  %v444 = vsel %vm53, %v426, 0
  %446 = vmatprep.subr.mxu0 %v428
  %447 = vmatpush1.msra.mxu0 %v427
  %448 = vmatprep.subr.mxu0 %v430
  %449 = vmatpush1.msra.mxu0 %v429
  %450 = vmatprep.subr.mxu0 %v432
  %451 = vmatpush1.msra.mxu0 %v431
  %452 = vmatprep.subr.mxu0 %v434
  %453 = vmatpush1.msra.mxu0 %v433
  %454 = vmatprep.subr.mxu0 %v436
  %455 = vmatpush1.msra.mxu0 %v435
  %456 = vmatprep.subr.mxu0 %v438
  %457 = vmatpush1.msra.mxu0 %v437
  %458 = vmatprep.subr.mxu0 %v440
  %459 = vmatpush1.msra.mxu0 %v439
  %460 = vmatprep.subr.mxu0 %v442
  %461 = vmatpush1.msra.mxu0 %v441
  %462 = vmatprep.subr.mxu0 0.0
  %463 = vmatpush1.msra.mxu0 0.0
  %464 = vmatprep.subr.mxu0 0.0
  %465 = vmatpush1.msra.mxu0 0.0
  %466 = vmatprep.subr.mxu0 0.0
  %467 = vmatpush1.msra.mxu0 0.0
  %468 = vmatprep.subr.mxu0 0.0
  %469 = vmatpush1.msra.mxu0 0.0
  %470 = vmatprep.subr.mxu0 0.0
  %471 = vmatpush1.msra.mxu0 0.0
  %472 = vmatprep.subr.mxu0 0.0
  %473 = vmatpush1.msra.mxu0 0.0
  %474 = vmatprep.subr.mxu0 0.0
  %475 = vmatpush1.msra.mxu0 0.0
  %476 = vmatprep.subr.mxu0 0.0
  %477 = vmatpush1.msra.mxu0 0.0
  %478 = vmatprep.subr.mxu0 0.0
  %479 = vmatpush1.msra.mxu0 0.0
  %480 = vmatprep.subr.mxu0 0.0
  %481 = vmatpush1.msra.mxu0 0.0
  %482 = vmatprep.subr.mxu0 0.0
  %483 = vmatpush1.msra.mxu0 0.0
  %484 = vmatprep.subr.mxu0 0.0
  %485 = vmatpush1.msra.mxu0 0.0
  %486 = vmatprep.subr.mxu0 0.0
  %487 = vmatpush1.msra.mxu0 0.0
  %488 = vmatprep.subr.mxu0 0.0
  %489 = vmatpush1.msra.mxu0 0.0
  %490 = vmatprep.subr.mxu0 0.0
  %491 = vmatpush1.msra.mxu0 0.0
  %492 = vmatprep.subr.mxu0 0.0
  %493 = vmatpush1.msra.mxu0 0.0
  %494 = vmatprep.subr.mxu0 0.0
  %495 = vmatpush1.msra.mxu0 0.0
  %496 = vmatprep.subr.mxu0 0.0
  %497 = vmatpush1.msra.mxu0 0.0
  %498 = vmatprep.subr.mxu0 0.0
  %499 = vmatpush1.msra.mxu0 0.0
  %500 = vmatprep.subr.mxu0 0.0
  %501 = vmatpush1.msra.mxu0 0.0
  %502 = vmatprep.subr.mxu0 0.0
  %503 = vmatpush1.msra.mxu0 0.0
  %504 = vmatprep.subr.mxu0 0.0
  %505 = vmatpush1.msra.mxu0 0.0
  %506 = vmatprep.subr.mxu0 0.0
  %507 = vmatpush1.msra.mxu0 0.0
  %508 = vmatprep.subr.mxu0 0.0
  %509 = vmatpush1.msra.mxu0 0.0
  %510 = vmatprep.mubr.f32.mxu0 0.0
  %511 = vmatmul.mubr.f32.gmra.mrb[0].mxu0 %v444
  %v512 = vpop.f32.mrb[0].mxu0
  %v513 = vadd.f32 0.0, %v512
  %v514 = vpop.f32.mrb[0].mxu0
  %v515 = vadd.f32 0.0, %v514
  %516 = vdwg.mxu0
  %v519 = vrot.slane %v513, 4
  %v520 = vrot.slane %v515, 4
  %v523 = vadd.f32 %v424, %v519
  %v524 = vadd.f32 %v425, %v520
  %v525 = vxor.u32 %v523, 2147483648
  %v526 = vxor.u32 %v524, 2147483648
  %v527 = vmul.f32 %v525, 1.442695
  %v528 = vpow.pop %v527
  %v529 = vmul.f32 %v526, 1.442695
  %v530 = vpow.pop %v529
  %v531 = vadd.f32 %v528, 1.0
  %v532 = vadd.f32 %v530, 1.0
  %v533 = vrcp.pop %v531
  %v534 = vmul.f32 1.0, %v533
  %v535 = vrcp.pop %v532
  %v536 = vmul.f32 1.0, %v535
  %v537 = vtanh.pop %v524
  %v538 = vld [vmem:[#allocation5] sm:$0x3]
  %v540 = vrot.slane %v538, 4
  %541 = vrot.lane.b32.xlu0 %v540, 64
  %v542 = vpop.permute.xlu0 %541
  %v544 = vmul.f32 %v534, %v542
  %v545 = vmul.f32 %v534, %v537
  %547 = vrot.lane.b32.xlu0 %v545, 64
  %v548 = vpop.permute.xlu0 %547
  %v550 = vadd.f32 %v544, %v548
  %v551 = vtanh.pop %v550
  %v552 = vmul.f32 %v536, %v551
  %554 = vrot.lane.b32.xlu0 %v550, 64
  %v555 = vpop.permute.xlu0 %554
  %vm557 = vcmask 521220
  %558 = vst.msk [vmem:[#allocation5 - $0x4] sm:$0x30] %vm557, %v555
  %560 = vrot.lane.b32.xlu0 %v552, 64
  %v561 = vpop.permute.xlu0 %560
  %563 = vst.msk [vmem:[#allocation4 - $0x4] sm:$0x30] %vm557, %v561
  %vm564 = vcmask 259076
  %565 = vst.msk [vmem:[#allocation3] sm:$0x30] %vm564, %v561
  %vm566 = vcmask 521476
  %567 = vst.msk [vmem:[#allocation3 + $0x6] sm:$0x30] %vm566, %v561
  %v568 = vld [vmem:[#allocation2] sm:$0xc0]
  %v569 = vld [vmem:[#allocation2 + $0x8] sm:$0xc0]
  %v570 = vld [vmem:[#allocation4] sm:$0x3]
  %v571 = vld [vmem:[%s3] sm:$0xff]
  %v572 = vld [vmem:[%s3 + $0x8] sm:$0xff]
  %v573 = vld [vmem:[%s3 + $0x10] sm:$0xff]
  %v574 = vld [vmem:[%s3 + $0x18] sm:$0xff]
  %v575 = vld [vmem:[%s3 + $0x20] sm:$0xff]
  %v576 = vld [vmem:[%s3 + $0x28] sm:$0xff]
  %v577 = vld [vmem:[%s3 + $0x30] sm:$0xff]
  %v578 = vld [vmem:[%s3 + $0x38] sm:$0xff]
  %v579 = vld [vmem:[%s3 + $0x40] sm:$0xff]
  %v580 = vld [vmem:[%s3 + $0x48] sm:$0xff]
  %v581 = vld [vmem:[%s3 + $0x50] sm:$0xff]
  %v582 = vld [vmem:[%s3 + $0x58] sm:$0xff]
  %v583 = vld [vmem:[%s3 + $0x60] sm:$0xff]
  %v584 = vld [vmem:[%s3 + $0x68] sm:$0xff]
  %v585 = vld [vmem:[%s3 + $0x70] sm:$0xff]
  %v586 = vld [vmem:[%s3 + $0x78] sm:$0xff]
  %v588 = vsel %vm53, %v570, 0
  %590 = vmatprep.subr.mxu0 %v572
  %591 = vmatpush1.msra.mxu0 %v571
  %592 = vmatprep.subr.mxu0 %v574
  %593 = vmatpush1.msra.mxu0 %v573
  %594 = vmatprep.subr.mxu0 %v576
  %595 = vmatpush1.msra.mxu0 %v575
  %596 = vmatprep.subr.mxu0 %v578
  %597 = vmatpush1.msra.mxu0 %v577
  %598 = vmatprep.subr.mxu0 %v580
  %599 = vmatpush1.msra.mxu0 %v579
  %600 = vmatprep.subr.mxu0 %v582
  %601 = vmatpush1.msra.mxu0 %v581
  %602 = vmatprep.subr.mxu0 %v584
  %603 = vmatpush1.msra.mxu0 %v583
  %604 = vmatprep.subr.mxu0 %v586
  %605 = vmatpush1.msra.mxu0 %v585
  %606 = vmatprep.subr.mxu0 0.0
  %607 = vmatpush1.msra.mxu0 0.0
  %608 = vmatprep.subr.mxu0 0.0
  %609 = vmatpush1.msra.mxu0 0.0
  %610 = vmatprep.subr.mxu0 0.0
  %611 = vmatpush1.msra.mxu0 0.0
  %612 = vmatprep.subr.mxu0 0.0
  %613 = vmatpush1.msra.mxu0 0.0
  %614 = vmatprep.subr.mxu0 0.0
  %615 = vmatpush1.msra.mxu0 0.0
  %616 = vmatprep.subr.mxu0 0.0
  %617 = vmatpush1.msra.mxu0 0.0
  %618 = vmatprep.subr.mxu0 0.0
  %619 = vmatpush1.msra.mxu0 0.0
  %620 = vmatprep.subr.mxu0 0.0
  %621 = vmatpush1.msra.mxu0 0.0
  %622 = vmatprep.subr.mxu0 0.0
  %623 = vmatpush1.msra.mxu0 0.0
  %624 = vmatprep.subr.mxu0 0.0
  %625 = vmatpush1.msra.mxu0 0.0
  %626 = vmatprep.subr.mxu0 0.0
  %627 = vmatpush1.msra.mxu0 0.0
  %628 = vmatprep.subr.mxu0 0.0
  %629 = vmatpush1.msra.mxu0 0.0
  %630 = vmatprep.subr.mxu0 0.0
  %631 = vmatpush1.msra.mxu0 0.0
  %632 = vmatprep.subr.mxu0 0.0
  %633 = vmatpush1.msra.mxu0 0.0
  %634 = vmatprep.subr.mxu0 0.0
  %635 = vmatpush1.msra.mxu0 0.0
  %636 = vmatprep.subr.mxu0 0.0
  %637 = vmatpush1.msra.mxu0 0.0
  %638 = vmatprep.subr.mxu0 0.0
  %639 = vmatpush1.msra.mxu0 0.0
  %640 = vmatprep.subr.mxu0 0.0
  %641 = vmatpush1.msra.mxu0 0.0
  %642 = vmatprep.subr.mxu0 0.0
  %643 = vmatpush1.msra.mxu0 0.0
  %644 = vmatprep.subr.mxu0 0.0
  %645 = vmatpush1.msra.mxu0 0.0
  %646 = vmatprep.subr.mxu0 0.0
  %647 = vmatpush1.msra.mxu0 0.0
  %648 = vmatprep.subr.mxu0 0.0
  %649 = vmatpush1.msra.mxu0 0.0
  %650 = vmatprep.subr.mxu0 0.0
  %651 = vmatpush1.msra.mxu0 0.0
  %652 = vmatprep.subr.mxu0 0.0
  %653 = vmatpush1.msra.mxu0 0.0
  %654 = vmatprep.mubr.f32.mxu0 0.0
  %655 = vmatmul.mubr.f32.gmra.mrb[0].mxu0 %v588
  %v656 = vpop.f32.mrb[0].mxu0
  %v657 = vadd.f32 0.0, %v656
  %v658 = vpop.f32.mrb[0].mxu0
  %v659 = vadd.f32 0.0, %v658
  %660 = vdwg.mxu0
  %v663 = vrot.slane %v657, 2
  %v664 = vrot.slane %v659, 2
  %v667 = vadd.f32 %v568, %v663
  %v668 = vadd.f32 %v569, %v664
  %v669 = vxor.u32 %v667, 2147483648
  %v670 = vxor.u32 %v668, 2147483648
  %v671 = vmul.f32 %v669, 1.442695
  %v672 = vpow.pop %v671
  %v673 = vmul.f32 %v670, 1.442695
  %v674 = vpow.pop %v673
  %v675 = vadd.f32 %v672, 1.0
  %v676 = vadd.f32 %v674, 1.0
  %v677 = vrcp.pop %v675
  %v678 = vmul.f32 1.0, %v677
  %v679 = vrcp.pop %v676
  %v680 = vmul.f32 1.0, %v679
  %v681 = vtanh.pop %v668
  %v682 = vld [vmem:[#allocation5] sm:$0x3]
  %v684 = vrot.slane %v682, 2
  %685 = vrot.lane.b32.xlu0 %v684, 64
  %v686 = vpop.permute.xlu0 %685
  %v688 = vmul.f32 %v678, %v686
  %v689 = vmul.f32 %v678, %v681
  %691 = vrot.lane.b32.xlu0 %v689, 64
  %v692 = vpop.permute.xlu0 %691
  %v694 = vadd.f32 %v688, %v692
  %v695 = vtanh.pop %v694
  %v696 = vmul.f32 %v680, %v695
  %698 = vrot.lane.b32.xlu0 %v694, 64
  %v699 = vpop.permute.xlu0 %698
  %vm701 = vcmask 523270
  %702 = vst.msk [vmem:[#allocation5 - $0x6] sm:$0xc0] %vm701, %v699
  %704 = vrot.lane.b32.xlu0 %v696, 64
  %v705 = vpop.permute.xlu0 %704
  %707 = vst.msk [vmem:[#allocation4 - $0x6] sm:$0xc0] %vm701, %v705
  %vm708 = vcmask 261126
  %709 = vst.msk [vmem:[#allocation3] sm:$0xc0] %vm708, %v705
  %vm710 = vcmask 523526
  %711 = vst.msk [vmem:[#allocation3 + $0x2] sm:$0xc0] %vm710, %v705
  %v712 = vld [vmem:[#allocation2 + $0x10] sm:$0x3]
  %v713 = vld [vmem:[#allocation2 + $0x18] sm:$0x3]
  %v714 = vld [vmem:[#allocation4] sm:$0x3]
  %v715 = vld [vmem:[%s3] sm:$0xff]
  %v716 = vld [vmem:[%s3 + $0x8] sm:$0xff]
  %v717 = vld [vmem:[%s3 + $0x10] sm:$0xff]
  %v718 = vld [vmem:[%s3 + $0x18] sm:$0xff]
  %v719 = vld [vmem:[%s3 + $0x20] sm:$0xff]
  %v720 = vld [vmem:[%s3 + $0x28] sm:$0xff]
  %v721 = vld [vmem:[%s3 + $0x30] sm:$0xff]
  %v722 = vld [vmem:[%s3 + $0x38] sm:$0xff]
  %v723 = vld [vmem:[%s3 + $0x40] sm:$0xff]
  %v724 = vld [vmem:[%s3 + $0x48] sm:$0xff]
  %v725 = vld [vmem:[%s3 + $0x50] sm:$0xff]
  %v726 = vld [vmem:[%s3 + $0x58] sm:$0xff]
  %v727 = vld [vmem:[%s3 + $0x60] sm:$0xff]
  %v728 = vld [vmem:[%s3 + $0x68] sm:$0xff]
  %v729 = vld [vmem:[%s3 + $0x70] sm:$0xff]
  %v730 = vld [vmem:[%s3 + $0x78] sm:$0xff]
  %v732 = vsel %vm53, %v714, 0
  %734 = vmatprep.subr.mxu0 %v716
  %735 = vmatpush1.msra.mxu0 %v715
  %736 = vmatprep.subr.mxu0 %v718
  %737 = vmatpush1.msra.mxu0 %v717
  %738 = vmatprep.subr.mxu0 %v720
  %739 = vmatpush1.msra.mxu0 %v719
  %740 = vmatprep.subr.mxu0 %v722
  %741 = vmatpush1.msra.mxu0 %v721
  %742 = vmatprep.subr.mxu0 %v724
  %743 = vmatpush1.msra.mxu0 %v723
  %744 = vmatprep.subr.mxu0 %v726
  %745 = vmatpush1.msra.mxu0 %v725
  %746 = vmatprep.subr.mxu0 %v728
  %747 = vmatpush1.msra.mxu0 %v727
  %748 = vmatprep.subr.mxu0 %v730
  %749 = vmatpush1.msra.mxu0 %v729
  %750 = vmatprep.subr.mxu0 0.0
  %751 = vmatpush1.msra.mxu0 0.0
  %752 = vmatprep.subr.mxu0 0.0
  %753 = vmatpush1.msra.mxu0 0.0
  %754 = vmatprep.subr.mxu0 0.0
  %755 = vmatpush1.msra.mxu0 0.0
  %756 = vmatprep.subr.mxu0 0.0
  %757 = vmatpush1.msra.mxu0 0.0
  %758 = vmatprep.subr.mxu0 0.0
  %759 = vmatpush1.msra.mxu0 0.0
  %760 = vmatprep.subr.mxu0 0.0
  %761 = vmatpush1.msra.mxu0 0.0
  %762 = vmatprep.subr.mxu0 0.0
  %763 = vmatpush1.msra.mxu0 0.0
  %764 = vmatprep.subr.mxu0 0.0
  %765 = vmatpush1.msra.mxu0 0.0
  %766 = vmatprep.subr.mxu0 0.0
  %767 = vmatpush1.msra.mxu0 0.0
  %768 = vmatprep.subr.mxu0 0.0
  %769 = vmatpush1.msra.mxu0 0.0
  %770 = vmatprep.subr.mxu0 0.0
  %771 = vmatpush1.msra.mxu0 0.0
  %772 = vmatprep.subr.mxu0 0.0
  %773 = vmatpush1.msra.mxu0 0.0
  %774 = vmatprep.subr.mxu0 0.0
  %775 = vmatpush1.msra.mxu0 0.0
  %776 = vmatprep.subr.mxu0 0.0
  %777 = vmatpush1.msra.mxu0 0.0
  %778 = vmatprep.subr.mxu0 0.0
  %779 = vmatpush1.msra.mxu0 0.0
  %780 = vmatprep.subr.mxu0 0.0
  %781 = vmatpush1.msra.mxu0 0.0
  %782 = vmatprep.subr.mxu0 0.0
  %783 = vmatpush1.msra.mxu0 0.0
  %784 = vmatprep.subr.mxu0 0.0
  %785 = vmatpush1.msra.mxu0 0.0
  %786 = vmatprep.subr.mxu0 0.0
  %787 = vmatpush1.msra.mxu0 0.0
  %788 = vmatprep.subr.mxu0 0.0
  %789 = vmatpush1.msra.mxu0 0.0
  %790 = vmatprep.subr.mxu0 0.0
  %791 = vmatpush1.msra.mxu0 0.0
  %792 = vmatprep.subr.mxu0 0.0
  %793 = vmatpush1.msra.mxu0 0.0
  %794 = vmatprep.subr.mxu0 0.0
  %795 = vmatpush1.msra.mxu0 0.0
  %796 = vmatprep.subr.mxu0 0.0
  %797 = vmatpush1.msra.mxu0 0.0
  %798 = vmatprep.mubr.f32.mxu0 0.0
  %799 = vmatmul.mubr.f32.gmra.mrb[0].mxu0 %v732
  %v800 = vpop.f32.mrb[0].mxu0
  %v801 = vadd.f32 0.0, %v800
  %v802 = vpop.f32.mrb[0].mxu0
  %v803 = vadd.f32 0.0, %v802
  %804 = vdwg.mxu0
  %v805 = vadd.f32 %v712, %v801
  %v806 = vadd.f32 %v713, %v803
  %v807 = vxor.u32 %v805, 2147483648
  %v808 = vxor.u32 %v806, 2147483648
  %v809 = vmul.f32 %v807, 1.442695
  %v810 = vpow.pop %v809
  %v811 = vmul.f32 %v808, 1.442695
  %v812 = vpow.pop %v811
  %v813 = vadd.f32 %v810, 1.0
  %v814 = vadd.f32 %v812, 1.0
  %v815 = vrcp.pop %v813
  %v816 = vmul.f32 1.0, %v815
  %v817 = vrcp.pop %v814
  %v818 = vmul.f32 1.0, %v817
  %v819 = vtanh.pop %v806
  %v820 = vld [vmem:[#allocation5] sm:$0x3]
  %822 = vrot.lane.b32.xlu0 %v820, 64
  %v823 = vpop.permute.xlu0 %822
  %v825 = vmul.f32 %v816, %v823
  %v826 = vmul.f32 %v816, %v819
  %828 = vrot.lane.b32.xlu0 %v826, 64
  %v829 = vpop.permute.xlu0 %828
  %v831 = vadd.f32 %v825, %v829
  %v832 = vtanh.pop %v831
  %v833 = vmul.f32 %v818, %v832
  %835 = vrot.lane.b32.xlu0 %v831, 64
  %v836 = vpop.permute.xlu0 %835
  %838 = vst.msk [vmem:[#allocation5] sm:$0x3] %vm141, %v836
  %840 = vrot.lane.b32.xlu0 %v833, 64
  %v841 = vpop.permute.xlu0 %840
  %843 = vst.msk [vmem:[#allocation4] sm:$0x3] %vm141, %v841
  %844 = vst.msk [vmem:[#allocation3 + $0x8] sm:$0x3] %vm276, %v841
  %845 = vst.msk [vmem:[#allocation3 + $0x6] sm:$0x3] %vm278, %v841
  %v846 = vld [vmem:[#allocation2 + $0x10] sm:$0xc]
  %v847 = vld [vmem:[#allocation2 + $0x18] sm:$0xc]
  %v848 = vld [vmem:[#allocation4] sm:$0x3]
  %v849 = vld [vmem:[%s3] sm:$0xff]
  %v850 = vld [vmem:[%s3 + $0x8] sm:$0xff]
  %v851 = vld [vmem:[%s3 + $0x10] sm:$0xff]
  %v852 = vld [vmem:[%s3 + $0x18] sm:$0xff]
  %v853 = vld [vmem:[%s3 + $0x20] sm:$0xff]
  %v854 = vld [vmem:[%s3 + $0x28] sm:$0xff]
  %v855 = vld [vmem:[%s3 + $0x30] sm:$0xff]
  %v856 = vld [vmem:[%s3 + $0x38] sm:$0xff]
  %v857 = vld [vmem:[%s3 + $0x40] sm:$0xff]
  %v858 = vld [vmem:[%s3 + $0x48] sm:$0xff]
  %v859 = vld [vmem:[%s3 + $0x50] sm:$0xff]
  %v860 = vld [vmem:[%s3 + $0x58] sm:$0xff]
  %v861 = vld [vmem:[%s3 + $0x60] sm:$0xff]
  %v862 = vld [vmem:[%s3 + $0x68] sm:$0xff]
  %v863 = vld [vmem:[%s3 + $0x70] sm:$0xff]
  %v864 = vld [vmem:[%s3 + $0x78] sm:$0xff]
  %v866 = vsel %vm53, %v848, 0
  %868 = vmatprep.subr.mxu0 %v850
  %869 = vmatpush1.msra.mxu0 %v849
  %870 = vmatprep.subr.mxu0 %v852
  %871 = vmatpush1.msra.mxu0 %v851
  %872 = vmatprep.subr.mxu0 %v854
  %873 = vmatpush1.msra.mxu0 %v853
  %874 = vmatprep.subr.mxu0 %v856
  %875 = vmatpush1.msra.mxu0 %v855
  %876 = vmatprep.subr.mxu0 %v858
  %877 = vmatpush1.msra.mxu0 %v857
  %878 = vmatprep.subr.mxu0 %v860
  %879 = vmatpush1.msra.mxu0 %v859
  %880 = vmatprep.subr.mxu0 %v862
  %881 = vmatpush1.msra.mxu0 %v861
  %882 = vmatprep.subr.mxu0 %v864
  %883 = vmatpush1.msra.mxu0 %v863
  %884 = vmatprep.subr.mxu0 0.0
  %885 = vmatpush1.msra.mxu0 0.0
  %886 = vmatprep.subr.mxu0 0.0
  %887 = vmatpush1.msra.mxu0 0.0
  %888 = vmatprep.subr.mxu0 0.0
  %889 = vmatpush1.msra.mxu0 0.0
  %890 = vmatprep.subr.mxu0 0.0
  %891 = vmatpush1.msra.mxu0 0.0
  %892 = vmatprep.subr.mxu0 0.0
  %893 = vmatpush1.msra.mxu0 0.0
  %894 = vmatprep.subr.mxu0 0.0
  %895 = vmatpush1.msra.mxu0 0.0
  %896 = vmatprep.subr.mxu0 0.0
  %897 = vmatpush1.msra.mxu0 0.0
  %898 = vmatprep.subr.mxu0 0.0
  %899 = vmatpush1.msra.mxu0 0.0
  %900 = vmatprep.subr.mxu0 0.0
  %901 = vmatpush1.msra.mxu0 0.0
  %902 = vmatprep.subr.mxu0 0.0
  %903 = vmatpush1.msra.mxu0 0.0
  %904 = vmatprep.subr.mxu0 0.0
  %905 = vmatpush1.msra.mxu0 0.0
  %906 = vmatprep.subr.mxu0 0.0
  %907 = vmatpush1.msra.mxu0 0.0
  %908 = vmatprep.subr.mxu0 0.0
  %909 = vmatpush1.msra.mxu0 0.0
  %910 = vmatprep.subr.mxu0 0.0
  %911 = vmatpush1.msra.mxu0 0.0
  %912 = vmatprep.subr.mxu0 0.0
  %913 = vmatpush1.msra.mxu0 0.0
  %914 = vmatprep.subr.mxu0 0.0
  %915 = vmatpush1.msra.mxu0 0.0
  %916 = vmatprep.subr.mxu0 0.0
  %917 = vmatpush1.msra.mxu0 0.0
  %918 = vmatprep.subr.mxu0 0.0
  %919 = vmatpush1.msra.mxu0 0.0
  %920 = vmatprep.subr.mxu0 0.0
  %921 = vmatpush1.msra.mxu0 0.0
  %922 = vmatprep.subr.mxu0 0.0
  %923 = vmatpush1.msra.mxu0 0.0
  %924 = vmatprep.subr.mxu0 0.0
  %925 = vmatpush1.msra.mxu0 0.0
  %926 = vmatprep.subr.mxu0 0.0
  %927 = vmatpush1.msra.mxu0 0.0
  %928 = vmatprep.subr.mxu0 0.0
  %929 = vmatpush1.msra.mxu0 0.0
  %930 = vmatprep.subr.mxu0 0.0
  %931 = vmatpush1.msra.mxu0 0.0
  %932 = vmatprep.mubr.f32.mxu0 0.0
  %933 = vmatmul.mubr.f32.gmra.mrb[0].mxu0 %v866
  %v934 = vpop.f32.mrb[0].mxu0
  %v935 = vadd.f32 0.0, %v934
  %v936 = vpop.f32.mrb[0].mxu0
  %v937 = vadd.f32 0.0, %v936
  %938 = vdwg.mxu0
  %v941 = vrot.slane %v935, 6
  %v942 = vrot.slane %v937, 6
  %v945 = vadd.f32 %v846, %v941
  %v946 = vadd.f32 %v847, %v942
  %v947 = vxor.u32 %v945, 2147483648
  %v948 = vxor.u32 %v946, 2147483648
  %v949 = vmul.f32 %v947, 1.442695
  %v950 = vpow.pop %v949
  %v951 = vmul.f32 %v948, 1.442695
  %v952 = vpow.pop %v951
  %v953 = vadd.f32 %v950, 1.0
  %v954 = vadd.f32 %v952, 1.0
  %v955 = vrcp.pop %v953
  %v956 = vmul.f32 1.0, %v955
  %v957 = vrcp.pop %v954
  %v958 = vmul.f32 1.0, %v957
  %v959 = vtanh.pop %v946
  %v960 = vld [vmem:[#allocation5] sm:$0x3]
  %v962 = vrot.slane %v960, 6
  %963 = vrot.lane.b32.xlu0 %v962, 64
  %v964 = vpop.permute.xlu0 %963
  %v966 = vmul.f32 %v956, %v964
  %v967 = vmul.f32 %v956, %v959
  %969 = vrot.lane.b32.xlu0 %v967, 64
  %v970 = vpop.permute.xlu0 %969
  %v972 = vadd.f32 %v966, %v970
  %v973 = vtanh.pop %v972
  %v974 = vmul.f32 %v958, %v973
  %976 = vrot.lane.b32.xlu0 %v972, 64
  %v977 = vpop.permute.xlu0 %976
  %979 = vst.msk [vmem:[#allocation5 - $0x2] sm:$0xc] %vm413, %v977
  %981 = vrot.lane.b32.xlu0 %v974, 64
  %v982 = vpop.permute.xlu0 %981
  %984 = vst.msk [vmem:[#allocation4 - $0x2] sm:$0xc] %vm413, %v982
  %985 = vst.msk [vmem:[#allocation3 + $0x8] sm:$0xc] %vm420, %v982
  %986 = vst.msk [vmem:[#allocation3 + $0x2] sm:$0xc] %vm422, %v982
  %v987 = vld [vmem:[#allocation2 + $0x10] sm:$0x30]
  %v988 = vld [vmem:[#allocation2 + $0x18] sm:$0x30]
  %v989 = vld [vmem:[#allocation4] sm:$0x3]
  %v990 = vld [vmem:[%s3] sm:$0xff]
  %v991 = vld [vmem:[%s3 + $0x8] sm:$0xff]
  %v992 = vld [vmem:[%s3 + $0x10] sm:$0xff]
  %v993 = vld [vmem:[%s3 + $0x18] sm:$0xff]
  %v994 = vld [vmem:[%s3 + $0x20] sm:$0xff]
  %v995 = vld [vmem:[%s3 + $0x28] sm:$0xff]
  %v996 = vld [vmem:[%s3 + $0x30] sm:$0xff]
  %v997 = vld [vmem:[%s3 + $0x38] sm:$0xff]
  %v998 = vld [vmem:[%s3 + $0x40] sm:$0xff]
  %v999 = vld [vmem:[%s3 + $0x48] sm:$0xff]
  %v1000 = vld [vmem:[%s3 + $0x50] sm:$0xff]
  %v1001 = vld [vmem:[%s3 + $0x58] sm:$0xff]
  %v1002 = vld [vmem:[%s3 + $0x60] sm:$0xff]
  %v1003 = vld [vmem:[%s3 + $0x68] sm:$0xff]
  %v1004 = vld [vmem:[%s3 + $0x70] sm:$0xff]
  %v1005 = vld [vmem:[%s3 + $0x78] sm:$0xff]
  %v1007 = vsel %vm53, %v989, 0
  %1009 = vmatprep.subr.mxu0 %v991
  %1010 = vmatpush1.msra.mxu0 %v990
  %1011 = vmatprep.subr.mxu0 %v993
  %1012 = vmatpush1.msra.mxu0 %v992
  %1013 = vmatprep.subr.mxu0 %v995
  %1014 = vmatpush1.msra.mxu0 %v994
  %1015 = vmatprep.subr.mxu0 %v997
  %1016 = vmatpush1.msra.mxu0 %v996
  %1017 = vmatprep.subr.mxu0 %v999
  %1018 = vmatpush1.msra.mxu0 %v998
  %1019 = vmatprep.subr.mxu0 %v1001
  %1020 = vmatpush1.msra.mxu0 %v1000
  %1021 = vmatprep.subr.mxu0 %v1003
  %1022 = vmatpush1.msra.mxu0 %v1002
  %1023 = vmatprep.subr.mxu0 %v1005
  %1024 = vmatpush1.msra.mxu0 %v1004
  %1025 = vmatprep.subr.mxu0 0.0
  %1026 = vmatpush1.msra.mxu0 0.0
  %1027 = vmatprep.subr.mxu0 0.0
  %1028 = vmatpush1.msra.mxu0 0.0
  %1029 = vmatprep.subr.mxu0 0.0
  %1030 = vmatpush1.msra.mxu0 0.0
  %1031 = vmatprep.subr.mxu0 0.0
  %1032 = vmatpush1.msra.mxu0 0.0
  %1033 = vmatprep.subr.mxu0 0.0
  %1034 = vmatpush1.msra.mxu0 0.0
  %1035 = vmatprep.subr.mxu0 0.0
  %1036 = vmatpush1.msra.mxu0 0.0
  %1037 = vmatprep.subr.mxu0 0.0
  %1038 = vmatpush1.msra.mxu0 0.0
  %1039 = vmatprep.subr.mxu0 0.0
  %1040 = vmatpush1.msra.mxu0 0.0
  %1041 = vmatprep.subr.mxu0 0.0
  %1042 = vmatpush1.msra.mxu0 0.0
  %1043 = vmatprep.subr.mxu0 0.0
  %1044 = vmatpush1.msra.mxu0 0.0
  %1045 = vmatprep.subr.mxu0 0.0
  %1046 = vmatpush1.msra.mxu0 0.0
  %1047 = vmatprep.subr.mxu0 0.0
  %1048 = vmatpush1.msra.mxu0 0.0
  %1049 = vmatprep.subr.mxu0 0.0
  %1050 = vmatpush1.msra.mxu0 0.0
  %1051 = vmatprep.subr.mxu0 0.0
  %1052 = vmatpush1.msra.mxu0 0.0
  %1053 = vmatprep.subr.mxu0 0.0
  %1054 = vmatpush1.msra.mxu0 0.0
  %1055 = vmatprep.subr.mxu0 0.0
  %1056 = vmatpush1.msra.mxu0 0.0
  %1057 = vmatprep.subr.mxu0 0.0
  %1058 = vmatpush1.msra.mxu0 0.0
  %1059 = vmatprep.subr.mxu0 0.0
  %1060 = vmatpush1.msra.mxu0 0.0
  %1061 = vmatprep.subr.mxu0 0.0
  %1062 = vmatpush1.msra.mxu0 0.0
  %1063 = vmatprep.subr.mxu0 0.0
  %1064 = vmatpush1.msra.mxu0 0.0
  %1065 = vmatprep.subr.mxu0 0.0
  %1066 = vmatpush1.msra.mxu0 0.0
  %1067 = vmatprep.subr.mxu0 0.0
  %1068 = vmatpush1.msra.mxu0 0.0
  %1069 = vmatprep.subr.mxu0 0.0
  %1070 = vmatpush1.msra.mxu0 0.0
  %1071 = vmatprep.subr.mxu0 0.0
  %1072 = vmatpush1.msra.mxu0 0.0
  %1073 = vmatprep.mubr.f32.mxu0 0.0
  %1074 = vmatmul.mubr.f32.gmra.mrb[0].mxu0 %v1007
  %v1075 = vpop.f32.mrb[0].mxu0
  %v1076 = vadd.f32 0.0, %v1075
  %v1077 = vpop.f32.mrb[0].mxu0
  %v1078 = vadd.f32 0.0, %v1077
  %1079 = vdwg.mxu0
  %v1082 = vrot.slane %v1076, 4
  %v1083 = vrot.slane %v1078, 4
  %v1086 = vadd.f32 %v987, %v1082
  %v1087 = vadd.f32 %v988, %v1083
  %v1088 = vxor.u32 %v1086, 2147483648
  %v1089 = vxor.u32 %v1087, 2147483648
  %v1090 = vmul.f32 %v1088, 1.442695
  %v1091 = vpow.pop %v1090
  %v1092 = vmul.f32 %v1089, 1.442695
  %v1093 = vpow.pop %v1092
  %v1094 = vadd.f32 %v1091, 1.0
  %v1095 = vadd.f32 %v1093, 1.0
  %v1096 = vrcp.pop %v1094
  %v1097 = vmul.f32 1.0, %v1096
  %v1098 = vrcp.pop %v1095
  %v1099 = vmul.f32 1.0, %v1098
  %v1100 = vtanh.pop %v1087
  %v1101 = vld [vmem:[#allocation5] sm:$0x3]
  %v1103 = vrot.slane %v1101, 4
  %1104 = vrot.lane.b32.xlu0 %v1103, 64
  %v1105 = vpop.permute.xlu0 %1104
  %v1107 = vmul.f32 %v1097, %v1105
  %v1108 = vmul.f32 %v1097, %v1100
  %1110 = vrot.lane.b32.xlu0 %v1108, 64
  %v1111 = vpop.permute.xlu0 %1110
  %v1113 = vadd.f32 %v1107, %v1111
  %v1114 = vtanh.pop %v1113
  %v1115 = vmul.f32 %v1099, %v1114
  %1117 = vrot.lane.b32.xlu0 %v1113, 64
  %v1118 = vpop.permute.xlu0 %1117
  %1120 = vst.msk [vmem:[#allocation5 - $0x4] sm:$0x30] %vm557, %v1118
  %1122 = vrot.lane.b32.xlu0 %v1115, 64
  %v1123 = vpop.permute.xlu0 %1122
  %1125 = vst.msk [vmem:[#allocation4 - $0x4] sm:$0x30] %vm557, %v1123
  %1126 = vst.msk [vmem:[#allocation3 + $0x8] sm:$0x30] %vm564, %v1123
  %1127 = vst.msk [vmem:[#allocation3 - $0x2] sm:$0x30] %vm566, %v1123
  %v1128 = vld [vmem:[#allocation2 + $0x10] sm:$0xc0]
  %v1129 = vld [vmem:[#allocation2 + $0x18] sm:$0xc0]
  %v1130 = vld [vmem:[#allocation4] sm:$0x3]
  %v1131 = vld [vmem:[%s3] sm:$0xff]
  %v1132 = vld [vmem:[%s3 + $0x8] sm:$0xff]
  %v1133 = vld [vmem:[%s3 + $0x10] sm:$0xff]
  %v1134 = vld [vmem:[%s3 + $0x18] sm:$0xff]
  %v1135 = vld [vmem:[%s3 + $0x20] sm:$0xff]
  %v1136 = vld [vmem:[%s3 + $0x28] sm:$0xff]
  %v1137 = vld [vmem:[%s3 + $0x30] sm:$0xff]
  %v1138 = vld [vmem:[%s3 + $0x38] sm:$0xff]
  %v1139 = vld [vmem:[%s3 + $0x40] sm:$0xff]
  %v1140 = vld [vmem:[%s3 + $0x48] sm:$0xff]
  %v1141 = vld [vmem:[%s3 + $0x50] sm:$0xff]
  %v1142 = vld [vmem:[%s3 + $0x58] sm:$0xff]
  %v1143 = vld [vmem:[%s3 + $0x60] sm:$0xff]
  %v1144 = vld [vmem:[%s3 + $0x68] sm:$0xff]
  %v1145 = vld [vmem:[%s3 + $0x70] sm:$0xff]
  %v1146 = vld [vmem:[%s3 + $0x78] sm:$0xff]
  %v1148 = vsel %vm53, %v1130, 0
  %1150 = vmatprep.subr.mxu0 %v1132
  %1151 = vmatpush1.msra.mxu0 %v1131
  %1152 = vmatprep.subr.mxu0 %v1134
  %1153 = vmatpush1.msra.mxu0 %v1133
  %1154 = vmatprep.subr.mxu0 %v1136
  %1155 = vmatpush1.msra.mxu0 %v1135
  %1156 = vmatprep.subr.mxu0 %v1138
  %1157 = vmatpush1.msra.mxu0 %v1137
  %1158 = vmatprep.subr.mxu0 %v1140
  %1159 = vmatpush1.msra.mxu0 %v1139
  %1160 = vmatprep.subr.mxu0 %v1142
  %1161 = vmatpush1.msra.mxu0 %v1141
  %1162 = vmatprep.subr.mxu0 %v1144
  %1163 = vmatpush1.msra.mxu0 %v1143
  %1164 = vmatprep.subr.mxu0 %v1146
  %1165 = vmatpush1.msra.mxu0 %v1145
  %1166 = vmatprep.subr.mxu0 0.0
  %1167 = vmatpush1.msra.mxu0 0.0
  %1168 = vmatprep.subr.mxu0 0.0
  %1169 = vmatpush1.msra.mxu0 0.0
  %1170 = vmatprep.subr.mxu0 0.0
  %1171 = vmatpush1.msra.mxu0 0.0
  %1172 = vmatprep.subr.mxu0 0.0
  %1173 = vmatpush1.msra.mxu0 0.0
  %1174 = vmatprep.subr.mxu0 0.0
  %1175 = vmatpush1.msra.mxu0 0.0
  %1176 = vmatprep.subr.mxu0 0.0
  %1177 = vmatpush1.msra.mxu0 0.0
  %1178 = vmatprep.subr.mxu0 0.0
  %1179 = vmatpush1.msra.mxu0 0.0
  %1180 = vmatprep.subr.mxu0 0.0
  %1181 = vmatpush1.msra.mxu0 0.0
  %1182 = vmatprep.subr.mxu0 0.0
  %1183 = vmatpush1.msra.mxu0 0.0
  %1184 = vmatprep.subr.mxu0 0.0
  %1185 = vmatpush1.msra.mxu0 0.0
  %1186 = vmatprep.subr.mxu0 0.0
  %1187 = vmatpush1.msra.mxu0 0.0
  %1188 = vmatprep.subr.mxu0 0.0
  %1189 = vmatpush1.msra.mxu0 0.0
  %1190 = vmatprep.subr.mxu0 0.0
  %1191 = vmatpush1.msra.mxu0 0.0
  %1192 = vmatprep.subr.mxu0 0.0
  %1193 = vmatpush1.msra.mxu0 0.0
  %1194 = vmatprep.subr.mxu0 0.0
  %1195 = vmatpush1.msra.mxu0 0.0
  %1196 = vmatprep.subr.mxu0 0.0
  %1197 = vmatpush1.msra.mxu0 0.0
  %1198 = vmatprep.subr.mxu0 0.0
  %1199 = vmatpush1.msra.mxu0 0.0
  %1200 = vmatprep.subr.mxu0 0.0
  %1201 = vmatpush1.msra.mxu0 0.0
  %1202 = vmatprep.subr.mxu0 0.0
  %1203 = vmatpush1.msra.mxu0 0.0
  %1204 = vmatprep.subr.mxu0 0.0
  %1205 = vmatpush1.msra.mxu0 0.0
  %1206 = vmatprep.subr.mxu0 0.0
  %1207 = vmatpush1.msra.mxu0 0.0
  %1208 = vmatprep.subr.mxu0 0.0
  %1209 = vmatpush1.msra.mxu0 0.0
  %1210 = vmatprep.subr.mxu0 0.0
  %1211 = vmatpush1.msra.mxu0 0.0
  %1212 = vmatprep.subr.mxu0 0.0
  %1213 = vmatpush1.msra.mxu0 0.0
  %1214 = vmatprep.mubr.f32.mxu0 0.0
  %1215 = vmatmul.mubr.f32.gmra.mrb[0].mxu0 %v1148
  %v1216 = vpop.f32.mrb[0].mxu0
  %v1217 = vadd.f32 0.0, %v1216
  %v1218 = vpop.f32.mrb[0].mxu0
  %v1219 = vadd.f32 0.0, %v1218
  %1220 = vdwg.mxu0
  %v1223 = vrot.slane %v1217, 2
  %v1224 = vrot.slane %v1219, 2
  %v1227 = vadd.f32 %v1128, %v1223
  %v1228 = vadd.f32 %v1129, %v1224
  %v1229 = vxor.u32 %v1227, 2147483648
  %v1230 = vxor.u32 %v1228, 2147483648
  %v1231 = vmul.f32 %v1229, 1.442695
  %v1232 = vpow.pop %v1231
  %v1233 = vmul.f32 %v1230, 1.442695
  %v1234 = vpow.pop %v1233
  %v1235 = vadd.f32 %v1232, 1.0
  %v1236 = vadd.f32 %v1234, 1.0
  %v1237 = vrcp.pop %v1235
  %v1238 = vmul.f32 1.0, %v1237
  %v1239 = vrcp.pop %v1236
  %v1240 = vmul.f32 1.0, %v1239
  %v1241 = vtanh.pop %v1228
  %v1242 = vld [vmem:[#allocation5] sm:$0x3]
  %v1244 = vrot.slane %v1242, 2
  %1245 = vrot.lane.b32.xlu0 %v1244, 64
  %v1246 = vpop.permute.xlu0 %1245
  %v1248 = vmul.f32 %v1238, %v1246
  %v1249 = vmul.f32 %v1238, %v1241
  %1251 = vrot.lane.b32.xlu0 %v1249, 64
  %v1252 = vpop.permute.xlu0 %1251
  %v1254 = vadd.f32 %v1248, %v1252
  %v1255 = vtanh.pop %v1254
  %v1256 = vmul.f32 %v1240, %v1255
  %1258 = vrot.lane.b32.xlu0 %v1254, 64
  %v1259 = vpop.permute.xlu0 %1258
  %1261 = vst.msk [vmem:[#allocation5 - $0x6] sm:$0xc0] %vm701, %v1259
  %1263 = vrot.lane.b32.xlu0 %v1256, 64
  %v1264 = vpop.permute.xlu0 %1263
  %1266 = vst.msk [vmem:[#allocation4 - $0x6] sm:$0xc0] %vm701, %v1264
  %1267 = vst.msk [vmem:[#allocation3 + $0x8] sm:$0xc0] %vm708, %v1264
  %1268 = vst.msk [vmem:[#allocation3 - $0x6] sm:$0xc0] %vm710, %v1264
  %v1269 = vld [vmem:[#allocation3] sm:$0xff]
  %v1270 = vld [vmem:[#allocation3 + $0x8] sm:$0xff]
  %v1271 = vld [vmem:[%s4] sm:$0xff]
  %v1272 = vld [vmem:[%s4 + $0x8] sm:$0xff]
  %v1273 = vld [vmem:[%s4 + $0x10] sm:$0xff]
  %v1274 = vld [vmem:[%s4 + $0x18] sm:$0xff]
  %v1275 = vld [vmem:[%s4 + $0x20] sm:$0xff]
  %v1276 = vld [vmem:[%s4 + $0x28] sm:$0xff]
  %v1277 = vld [vmem:[%s4 + $0x30] sm:$0xff]
  %v1278 = vld [vmem:[%s4 + $0x38] sm:$0xff]
  %v1279 = vld [vmem:[%s5] sm:$0x1]
  %v1281 = vlaneseq
  %v1282 = vshrl.u32 %v1281, 7
  %v1283 = vsub.s32 0, %v1282
  %v1284 = vrot.slane %v1279, %v1283
  %v1287 = vsel %vm53, %v1269, 0
  %v1290 = vsel %vm53, %v1270, 0
  %1292 = vmatprep.subr.mxu0 0.0
  %1293 = vmatpush1.msra.mxu0 %v1271
  %1294 = vmatprep.subr.mxu0 0.0
  %1295 = vmatpush1.msra.mxu0 %v1272
  %1296 = vmatprep.subr.mxu0 0.0
  %1297 = vmatpush1.msra.mxu0 %v1273
  %1298 = vmatprep.subr.mxu0 0.0
  %1299 = vmatpush1.msra.mxu0 %v1274
  %1300 = vmatprep.subr.mxu0 0.0
  %1301 = vmatpush1.msra.mxu0 %v1275
  %1302 = vmatprep.subr.mxu0 0.0
  %1303 = vmatpush1.msra.mxu0 %v1276
  %1304 = vmatprep.subr.mxu0 0.0
  %1305 = vmatpush1.msra.mxu0 %v1277
  %1306 = vmatprep.subr.mxu0 0.0
  %1307 = vmatpush1.msra.mxu0 %v1278
  %1308 = vmatprep.subr.mxu0 0.0
  %1309 = vmatpush1.msra.mxu0 0.0
  %1310 = vmatprep.subr.mxu0 0.0
  %1311 = vmatpush1.msra.mxu0 0.0
  %1312 = vmatprep.subr.mxu0 0.0
  %1313 = vmatpush1.msra.mxu0 0.0
  %1314 = vmatprep.subr.mxu0 0.0
  %1315 = vmatpush1.msra.mxu0 0.0
  %1316 = vmatprep.subr.mxu0 0.0
  %1317 = vmatpush1.msra.mxu0 0.0
  %1318 = vmatprep.subr.mxu0 0.0
  %1319 = vmatpush1.msra.mxu0 0.0
  %1320 = vmatprep.subr.mxu0 0.0
  %1321 = vmatpush1.msra.mxu0 0.0
  %1322 = vmatprep.subr.mxu0 0.0
  %1323 = vmatpush1.msra.mxu0 0.0
  %1324 = vmatprep.subr.mxu0 0.0
  %1325 = vmatpush1.msra.mxu0 0.0
  %1326 = vmatprep.subr.mxu0 0.0
  %1327 = vmatpush1.msra.mxu0 0.0
  %1328 = vmatprep.subr.mxu0 0.0
  %1329 = vmatpush1.msra.mxu0 0.0
  %1330 = vmatprep.subr.mxu0 0.0
  %1331 = vmatpush1.msra.mxu0 0.0
  %1332 = vmatprep.subr.mxu0 0.0
  %1333 = vmatpush1.msra.mxu0 0.0
  %1334 = vmatprep.subr.mxu0 0.0
  %1335 = vmatpush1.msra.mxu0 0.0
  %1336 = vmatprep.subr.mxu0 0.0
  %1337 = vmatpush1.msra.mxu0 0.0
  %1338 = vmatprep.subr.mxu0 0.0
  %1339 = vmatpush1.msra.mxu0 0.0
  %1340 = vmatprep.subr.mxu0 0.0
  %1341 = vmatpush1.msra.mxu0 0.0
  %1342 = vmatprep.subr.mxu0 0.0
  %1343 = vmatpush1.msra.mxu0 0.0
  %1344 = vmatprep.subr.mxu0 0.0
  %1345 = vmatpush1.msra.mxu0 0.0
  %1346 = vmatprep.subr.mxu0 0.0
  %1347 = vmatpush1.msra.mxu0 0.0
  %1348 = vmatprep.subr.mxu0 0.0
  %1349 = vmatpush1.msra.mxu0 0.0
  %1350 = vmatprep.subr.mxu0 0.0
  %1351 = vmatpush1.msra.mxu0 0.0
  %1352 = vmatprep.subr.mxu0 0.0
  %1353 = vmatpush1.msra.mxu0 0.0
  %1354 = vmatprep.subr.mxu0 0.0
  %1355 = vmatpush1.msra.mxu0 0.0
  %1356 = vmatprep.mubr.f32.mxu0 0.0
  %1357 = vmatmul.mubr.f32.gmra.mrb[0].mxu0 %v1287
  %v1358 = vpop.f32.mrb[0].mxu0
  %v1359 = vadd.f32 %v1284, %v1358
  %v1360 = vpop.f32.mrb[0].mxu0
  %1361 = vmatprep.mubr.f32.mxu0 0.0
  %1362 = vmatmul.mubr.f32.gmra.mrb[0].mxu0 %v1290
  %v1363 = vpop.f32.mrb[0].mxu0
  %v1364 = vadd.f32 %v1284, %v1363
  %v1365 = vpop.f32.mrb[0].mxu0
  %1366 = vdwg.mxu0
  %1367 = vst [vmem:[%s6] sm:$0xff] %v1359
  %1368 = vst [vmem:[%s6 + $0x8] sm:$0xff] %v1364
  // Predicated region
  $region26: #{ner_forward.1} parent=0 // pred_check
    _
  $region27: #{ner_forward.1} parent=0 // pred_check_branch
    %1370 = sbr.rel (0) target = $region29
  $region28: #{ner_forward.1} parent=0 // pred_region
    _
  $region29: #{ner_forward.1} parent=0 // pred_fallthru
    _
  // Predicated region
  $region30: #{ner_forward.1} parent=0 // pred_check
    _
  $region31: #{ner_forward.1} parent=0 // pred_check_branch
    %1372 = sbr.rel (0) target = $region33
  $region32: #{ner_forward.1} parent=0 // pred_region
    _
  $region33: #{ner_forward.1} parent=0 // pred_fallthru
    _

</llo_original>
